<compile_context>
chip_gen: v5e
topology: v5e:2x2
jax: 0.10.0
libtpu: 0.0.40
codegen_flags: <defaults>
</compile_context>

<pallas_src>
import functools

import jax
import jax.numpy as jnp
from jax import lax
from jax.experimental import pallas as pl
from jax.experimental.pallas import tpu as pltpu


# ----------------------------------------------------------------------------
# Pallas kernel
# ----------------------------------------------------------------------------
def _proj_kernel(vals_ref, xsq_ref, xt_ref, y_ref, res_ref, w_ref, idx_ref,
                 *, K, eps, alpha):
    """One (batch, M-tile) per grid step: brute-force KNN + inv-dist weighting."""
    Y = y_ref[0]                          # (TM, D)  embedding rows for this tile
    XT = xt_ref[...]                      # (D, N)   domain, pre-transposed
    xsq = xsq_ref[...]                    # (1, N)   precomputed ||x||^2
    vals = vals_ref[...]                  # (1, N)   function values on domain
    TM = Y.shape[0]
    N = XT.shape[1]

    # Squared pairwise distances (MXU matmul); sqrt is deferred to the K minima.
    gram = jnp.dot(Y, XT, preferred_element_type=jnp.float32)     # (TM, N)
    yn = jnp.sum(Y * Y, axis=-1, keepdims=True)                   # (TM, 1)
    d2 = jnp.maximum(yn - 2.0 * gram + xsq, 0.0)                  # (TM, N)

    col = lax.broadcasted_iota(jnp.int32, (TM, N), 1)

    # Iterative top-K smallest squared distances: 2 cross-lane reductions per k.
    d = d2
    acc_sel = jnp.zeros((TM, N), jnp.float32)     # unnormalized-weight selection
    w_cols, idx_cols = [], []
    for _ in range(K):
        dmin2 = jnp.min(d, axis=-1, keepdims=True)                            # (TM,1)
        idx = jnp.min(jnp.where(d == dmin2, col, N), axis=-1, keepdims=True)  # (TM,1)
        sel = col == idx
        dk = jnp.sqrt(dmin2)                       # sqrt only on the selected minima
        if alpha == 1.0:
            wk = pl.reciprocal(eps + dk)           # unnormalized weight (TM, 1)
        else:
            wk = jnp.exp(-alpha * jnp.log(eps + dk))
        acc_sel = acc_sel + jnp.where(sel, wk, 0.0)
        d = jnp.where(sel, jnp.inf, d)             # mask out the selected neighbor
        w_cols.append(wk)
        idx_cols.append(idx)

    wsum = w_cols[0]
    for wk in w_cols[1:]:
        wsum = wsum + wk
    inv_wsum = pl.reciprocal(wsum)                                 # (TM, 1)

    # Weighted gather/reduce of the function values in a single pass.
    res = jnp.sum(acc_sel * vals, axis=-1, keepdims=True) * inv_wsum   # (TM, 1)
    w_mat = jnp.concatenate(w_cols, axis=-1) * inv_wsum                # (TM, K)
    idx_mat = jnp.concatenate(idx_cols, axis=-1)                       # (TM, K)

    # Lane-dense stores: TM (a multiple of 128) is the minor / lane dimension.
    res_ref[...] = res.T[None]            # (1, 1, TM)
    w_ref[...] = w_mat.T[None]            # (1, K, TM)
    idx_ref[...] = idx_mat.T[None]        # (1, K, TM)


# ----------------------------------------------------------------------------
# Wrappers (glue)
# ----------------------------------------------------------------------------
def _pick_tile_m(M, N):
    """Largest M-tile (multiple of 128, divides M, <=512) whose ~8 live
    (TILE_M, N) f32 intermediates stay under ~16 MiB of scoped VMEM."""
    if M % 128 != 0:
        return M                           # single full-extent block
    budget_bytes = 16 * 1024 * 1024
    per_row_bytes = 8 * N * 4              # ~8 live (TILE_M, N) f32 arrays
    t = budget_bytes // per_row_bytes
    t = max(128, min(512, (t // 128) * 128, M))
    while M % t != 0:
        t -= 128
    return t


def batch_proj_function(*, function_vals, domain, embeddings, num_neighbors,
                        eps=1e-6, alpha=1.0):
    N, D = domain.shape
    B, M, D2 = embeddings.shape
    assert D == D2
    assert function_vals.shape == (N,)
    assert M == N, "reference asserts values.shape[0] == indices.shape[0]"
    K = int(num_neighbors)

    vals = function_vals.reshape(1, N).astype(jnp.float32)
    xt = domain.astype(jnp.float32).T                   # (D, N) hoisted transpose
    xsq = jnp.sum(xt * xt, axis=0, keepdims=True)       # (1, N)
    yf = embeddings.astype(jnp.float32)

    TILE_M = _pick_tile_m(M, N)
    grid = (B, M // TILE_M)

    kernel = functools.partial(_proj_kernel, K=K, eps=float(eps),
                               alpha=float(alpha))

    res, w, idx = pl.pallas_call(
        kernel,
        grid=grid,
        in_specs=[
            pl.BlockSpec((1, N), lambda b, m: (0, 0)),            # function values
            pl.BlockSpec((1, N), lambda b, m: (0, 0)),            # ||x||^2
            pl.BlockSpec((D, N), lambda b, m: (0, 0)),            # domain^T
            pl.BlockSpec((1, TILE_M, D), lambda b, m: (b, m, 0)),  # embeddings tile
        ],
        out_specs=[
            pl.BlockSpec((1, 1, TILE_M), lambda b, m: (b, 0, m)),
            pl.BlockSpec((1, K, TILE_M), lambda b, m: (b, 0, m)),
            pl.BlockSpec((1, K, TILE_M), lambda b, m: (b, 0, m)),
        ],
        out_shape=[
            jax.ShapeDtypeStruct((B, 1, M), jnp.float32),
            jax.ShapeDtypeStruct((B, K, M), jnp.float32),
            jax.ShapeDtypeStruct((B, K, M), jnp.int32),
        ],
        compiler_params=pltpu.CompilerParams(
            dimension_semantics=("parallel", "parallel"),
            vmem_limit_bytes=32 * 1024 * 1024,
        ),
    )(vals, xsq, xt, yf)

    # Back to the reference layouts: (B, M), (B, M, K), (B, M, K).
    return res[:, 0, :], jnp.transpose(w, (0, 2, 1)), jnp.transpose(idx, (0, 2, 1))


class SlicedWasserstein:
    """JAX/Pallas port: heavy compute at construction, identity forward."""

    def __init__(self, *, data, domain, embeddings, num_neighbors=1,
                 alpha=1.0, eps=1e-6):
        self.data, self.weights, self.indices = batch_proj_function(
            function_vals=data, domain=domain, embeddings=embeddings,
            num_neighbors=num_neighbors, eps=eps, alpha=alpha)

    def forward(self, x):
        # forward() is the identity in the reference module; no kernel needed.
        return x

    __call__ = forward


# ----------------------------------------------------------------------------
# Pure-JAX reference (for correctness check only)
# ----------------------------------------------------------------------------
def _ref_batch_proj(function_vals, domain, embeddings, K, eps, alpha):
    d2 = jnp.sum((embeddings[:, :, None, :] - domain[None, None, :, :]) ** 2, axis=-1)
    dist = jnp.sqrt(jnp.maximum(d2, 0.0))
    neg_top, idx = lax.top_k(-dist, K)
    dsel = -neg_top
    w = (eps + dsel) ** (-alpha)
    w = w / jnp.sum(w, axis=-1, keepdims=True)
    vals = function_vals[idx]                        # (B, M, K)
    res = jnp.sum(vals * w, axis=-1)
    return res, w, idx


if __name__ == "__main__":
    key = jax.random.PRNGKey(0)
    k1, k2, k3, k4 = jax.random.split(key, 4)

    N, D, B, K = 128, 8, 2, 2          # M == N required by the reference asserts
    data = jax.random.normal(k1, (N,), dtype=jnp.float32)
    domain = jax.random.normal(k2, (N, D), dtype=jnp.float32)
    embeddings = jax.random.normal(k3, (B, N, D), dtype=jnp.float32)

    model = SlicedWasserstein(data=data, domain=domain, embeddings=embeddings,
                              num_neighbors=K, alpha=1.0, eps=1e-6)
    jax.block_until_ready((model.data, model.weights, model.indices))

    # forward() is the identity
    x = jax.random.normal(k4, (2, 4, 16, 16), dtype=jnp.float32)
    y = jax.block_until_ready(model(x))

    # correctness checks against a pure-JAX reference
    ref_res, ref_w, ref_idx = _ref_batch_proj(data, domain, embeddings, K, 1e-6, 1.0)
    assert float(jnp.max(jnp.abs(model.data - ref_res))) < 1e-3
    assert float(jnp.max(jnp.abs(model.weights - ref_w))) < 1e-3
    assert bool(jnp.all(model.indices == ref_idx.astype(jnp.int32)))
    assert bool(jnp.all(y == x))

    print("KERNEL_OK")
</pallas_src>

<mosaic_0001>
module attributes {stable_mosaic.version = 11 : i64} {
  func.func @_proj_kernel(%arg0: i32, %arg1: i32, %arg2: memref<1x128xf32, #tpu.memory_space<vmem>>, %arg3: memref<1x128xf32, #tpu.memory_space<vmem>>, %arg4: memref<8x128xf32, #tpu.memory_space<vmem>>, %arg5: memref<1x128x8xf32, #tpu.memory_space<vmem>>, %arg6: memref<1x1x128xf32, #tpu.memory_space<vmem>>, %arg7: memref<1x2x128xf32, #tpu.memory_space<vmem>>, %arg8: memref<1x2x128xi32, #tpu.memory_space<vmem>>) attributes {dimension_semantics = [#tpu.dimension_semantics<parallel>, #tpu.dimension_semantics<parallel>], iteration_bounds = array<i64: 2, 1>, scalar_prefetch = 0 : i64, scratch_operands = 0 : i64, tpu.core_type = #tpu.core_type<tc>, window_params = [{pipeline_mode = #tpu.pipeline_mode<synchronous>, transform_indices = @transform_0, window_bounds = array<i64: 1, 128>}, {pipeline_mode = #tpu.pipeline_mode<synchronous>, transform_indices = @transform_1, window_bounds = array<i64: 1, 128>}, {pipeline_mode = #tpu.pipeline_mode<synchronous>, transform_indices = @transform_2, window_bounds = array<i64: 8, 128>}, {transform_indices = @transform_3, window_bounds = array<i64: 1, 128, 8>}, {transform_indices = @transform_4, window_bounds = array<i64: 1, 1, 128>}, {transform_indices = @transform_5, window_bounds = array<i64: 1, 2, 128>}, {transform_indices = @transform_6, window_bounds = array<i64: 1, 2, 128>}]} {
    %c0 = arith.constant 0 : index
    %c0_0 = arith.constant 0 : index
    %c0_1 = arith.constant 0 : index
    %0 = vector.load %arg5[%c0, %c0_0, %c0_1] : memref<1x128x8xf32, #tpu.memory_space<vmem>>, vector<1x128x8xf32>
    %1 = vector.shape_cast %0 : vector<1x128x8xf32> to vector<128x8xf32>
    %c0_2 = arith.constant 0 : index
    %c0_3 = arith.constant 0 : index
    %2 = vector.load %arg4[%c0_2, %c0_3] : memref<8x128xf32, #tpu.memory_space<vmem>>, vector<8x128xf32>
    %c0_4 = arith.constant 0 : index
    %c0_5 = arith.constant 0 : index
    %3 = vector.load %arg3[%c0_4, %c0_5] : memref<1x128xf32, #tpu.memory_space<vmem>>, vector<1x128xf32>
    %c0_6 = arith.constant 0 : index
    %c0_7 = arith.constant 0 : index
    %4 = vector.load %arg2[%c0_6, %c0_7] : memref<1x128xf32, #tpu.memory_space<vmem>>, vector<1x128xf32>
    %cst = arith.constant dense<0.000000e+00> : vector<128x128xf32>
    %5 = tpu.matmul %1, %2, %cst {dimension_numbers = #tpu.dot_dimension_numbers<[1], [0], [0], [1], [0, 0, 1, 1], [], []>} : vector<128x8xf32>, vector<8x128xf32>, vector<128x128xf32> -> vector<128x128xf32>
    %6 = arith.mulf %1, %1 : vector<128x8xf32>
    %cst_8 = arith.constant dense<0.000000e+00> : vector<128xf32>
    %7 = vector.multi_reduction <add>, %6, %cst_8 [1] : vector<128x8xf32> to vector<128xf32>
    %8 = vector.shape_cast %7 : vector<128xf32> to vector<128x1xf32>
    %cst_9 = arith.constant 2.000000e+00 : f32
    %9 = vector.broadcast %cst_9 : f32 to vector<128x128xf32>
    %10 = arith.mulf %9, %5 : vector<128x128xf32>
    %11 = vector.broadcast %8 : vector<128x1xf32> to vector<128x128xf32>
    %12 = arith.subf %11, %10 : vector<128x128xf32>
    %13 = vector.broadcast %3 : vector<1x128xf32> to vector<128x128xf32>
    %14 = arith.addf %12, %13 : vector<128x128xf32>
    %cst_10 = arith.constant 0.000000e+00 : f32
    %15 = vector.broadcast %cst_10 : f32 to vector<128x128xf32>
    %16 = arith.maximumf %14, %15 : vector<128x128xf32>
    %17 = tpu.iota {dimensions = array<i32: 1>} : vector<128x128xi32>
    %cst_11 = arith.constant 0.000000e+00 : f32
    %18 = vector.broadcast %cst_11 : f32 to vector<128x128xf32>
    %cst_12 = arith.constant dense<0x7F800000> : vector<128xf32>
    %19 = vector.multi_reduction <minimumf>, %16, %cst_12 [1] : vector<128x128xf32> to vector<128xf32>
    %20 = vector.shape_cast %19 : vector<128xf32> to vector<128x1xf32>
    %21 = vector.broadcast %20 : vector<128x1xf32> to vector<128x128xf32>
    %22 = arith.cmpf oeq, %16, %21 : vector<128x128xf32>
    %c128_i32 = arith.constant 128 : i32
    %23 = vector.broadcast %c128_i32 : i32 to vector<128x128xi32>
    %24 = arith.select %22, %17, %23 : vector<128x128xi1>, vector<128x128xi32>
    %cst_13 = arith.constant dense<2147483647> : vector<128xi32>
    %25 = vector.multi_reduction <minsi>, %24, %cst_13 [1] : vector<128x128xi32> to vector<128xi32>
    %26 = vector.shape_cast %25 : vector<128xi32> to vector<128x1xi32>
    %27 = vector.broadcast %26 : vector<128x1xi32> to vector<128x128xi32>
    %28 = arith.cmpi eq, %17, %27 : vector<128x128xi32>
    %29 = math.sqrt %20 : vector<128x1xf32>
    %cst_14 = arith.constant 9.99999997E-7 : f32
    %30 = vector.broadcast %cst_14 : f32 to vector<128x1xf32>
    %31 = arith.addf %30, %29 : vector<128x1xf32>
    %32 = tpu.reciprocal %31 : vector<128x1xf32> -> vector<128x1xf32>
    %cst_15 = arith.constant 0.000000e+00 : f32
    %33 = vector.shape_cast %32 : vector<128x1xf32> to vector<128x1xf32>
    %34 = vector.broadcast %33 : vector<128x1xf32> to vector<128x128xf32>
    %35 = vector.broadcast %cst_15 : f32 to vector<128x128xf32>
    %36 = arith.select %28, %34, %35 : vector<128x128xi1>, vector<128x128xf32>
    %37 = arith.addf %18, %36 : vector<128x128xf32>
    %cst_16 = arith.constant 0x7F800000 : f32
    %38 = vector.broadcast %cst_16 : f32 to vector<128x128xf32>
    %39 = arith.select %28, %38, %16 : vector<128x128xi1>, vector<128x128xf32>
    %cst_17 = arith.constant dense<0x7F800000> : vector<128xf32>
    %40 = vector.multi_reduction <minimumf>, %39, %cst_17 [1] : vector<128x128xf32> to vector<128xf32>
    %41 = vector.shape_cast %40 : vector<128xf32> to vector<128x1xf32>
    %42 = vector.broadcast %41 : vector<128x1xf32> to vector<128x128xf32>
    %43 = arith.cmpf oeq, %39, %42 : vector<128x128xf32>
    %c128_i32_18 = arith.constant 128 : i32
    %44 = vector.broadcast %c128_i32_18 : i32 to vector<128x128xi32>
    %45 = arith.select %43, %17, %44 : vector<128x128xi1>, vector<128x128xi32>
    %cst_19 = arith.constant dense<2147483647> : vector<128xi32>
    %46 = vector.multi_reduction <minsi>, %45, %cst_19 [1] : vector<128x128xi32> to vector<128xi32>
    %47 = vector.shape_cast %46 : vector<128xi32> to vector<128x1xi32>
    %48 = vector.broadcast %47 : vector<128x1xi32> to vector<128x128xi32>
    %49 = arith.cmpi eq, %17, %48 : vector<128x128xi32>
    %50 = math.sqrt %41 : vector<128x1xf32>
    %cst_20 = arith.constant 9.99999997E-7 : f32
    %51 = vector.broadcast %cst_20 : f32 to vector<128x1xf32>
    %52 = arith.addf %51, %50 : vector<128x1xf32>
    %53 = tpu.reciprocal %52 : vector<128x1xf32> -> vector<128x1xf32>
    %cst_21 = arith.constant 0.000000e+00 : f32
    %54 = vector.shape_cast %53 : vector<128x1xf32> to vector<128x1xf32>
    %55 = vector.broadcast %54 : vector<128x1xf32> to vector<128x128xf32>
    %56 = vector.broadcast %cst_21 : f32 to vector<128x128xf32>
    %57 = arith.select %49, %55, %56 : vector<128x128xi1>, vector<128x128xf32>
    %58 = arith.addf %37, %57 : vector<128x128xf32>
    %59 = arith.addf %32, %53 : vector<128x1xf32>
    %60 = tpu.reciprocal %59 : vector<128x1xf32> -> vector<128x1xf32>
    %61 = vector.broadcast %4 : vector<1x128xf32> to vector<128x128xf32>
    %62 = arith.mulf %58, %61 : vector<128x128xf32>
    %cst_22 = arith.constant dense<0.000000e+00> : vector<128xf32>
    %63 = vector.multi_reduction <add>, %62, %cst_22 [1] : vector<128x128xf32> to vector<128xf32>
    %64 = vector.shape_cast %63 : vector<128xf32> to vector<128x1xf32>
    %65 = arith.mulf %64, %60 : vector<128x1xf32>
    %66 = tpu.concatenate %32, %53 in 1 : vector<128x1xf32>, vector<128x1xf32> -> vector<128x2xf32>
    %67 = vector.broadcast %60 : vector<128x1xf32> to vector<128x2xf32>
    %68 = arith.mulf %66, %67 : vector<128x2xf32>
    %69 = tpu.concatenate %26, %47 in 1 : vector<128x1xi32>, vector<128x1xi32> -> vector<128x2xi32>
    %70 = tpu.transpose %65, [1, 0] : vector<128x1xf32> -> vector<1x128xf32>
    %71 = vector.shape_cast %70 : vector<1x128xf32> to vector<1x1x128xf32>
    %c0_23 = arith.constant 0 : index
    %c0_24 = arith.constant 0 : index
    %c0_25 = arith.constant 0 : index
    %72 = vector.load %arg6[%c0_23, %c0_24, %c0_25] : memref<1x1x128xf32, #tpu.memory_space<vmem>>, vector<1x1x128xf32>
    tpu.vector_store %arg6[%c0_23, %c0_24, %c0_25], %71 {strides = array<i32>} : memref<1x1x128xf32, #tpu.memory_space<vmem>>, vector<1x1x128xf32>,
    %73 = tpu.transpose %68, [1, 0] : vector<128x2xf32> -> vector<2x128xf32>
    %74 = vector.shape_cast %73 : vector<2x128xf32> to vector<1x2x128xf32>
    %c0_26 = arith.constant 0 : index
    %c0_27 = arith.constant 0 : index
    %c0_28 = arith.constant 0 : index
    %75 = vector.load %arg7[%c0_26, %c0_27, %c0_28] : memref<1x2x128xf32, #tpu.memory_space<vmem>>, vector<1x2x128xf32>
    tpu.vector_store %arg7[%c0_26, %c0_27, %c0_28], %74 {strides = array<i32>} : memref<1x2x128xf32, #tpu.memory_space<vmem>>, vector<1x2x128xf32>,
    %76 = tpu.transpose %69, [1, 0] : vector<128x2xi32> -> vector<2x128xi32>
    %77 = vector.shape_cast %76 : vector<2x128xi32> to vector<1x2x128xi32>
    %c0_29 = arith.constant 0 : index
    %c0_30 = arith.constant 0 : index
    %c0_31 = arith.constant 0 : index
    %78 = vector.load %arg8[%c0_29, %c0_30, %c0_31] : memref<1x2x128xi32, #tpu.memory_space<vmem>>, vector<1x2x128xi32>
    tpu.vector_store %arg8[%c0_29, %c0_30, %c0_31], %77 {strides = array<i32>} : memref<1x2x128xi32, #tpu.memory_space<vmem>>, vector<1x2x128xi32>,
    return
  }
  func.func @transform_0(%arg0: i32, %arg1: i32) -> (i32, i32) {
    %c0_i32 = arith.constant 0 : i32
    %c0_i32_0 = arith.constant 0 : i32
    %c0_i32_1 = arith.constant 0 : i32
    return %c0_i32, %c0_i32_0 : i32, i32
  }
  func.func @transform_1(%arg0: i32, %arg1: i32) -> (i32, i32) {
    %c0_i32 = arith.constant 0 : i32
    %c0_i32_0 = arith.constant 0 : i32
    %c0_i32_1 = arith.constant 0 : i32
    return %c0_i32, %c0_i32_0 : i32, i32
  }
  func.func @transform_2(%arg0: i32, %arg1: i32) -> (i32, i32) {
    %c0_i32 = arith.constant 0 : i32
    %c0_i32_0 = arith.constant 0 : i32
    %c0_i32_1 = arith.constant 0 : i32
    return %c0_i32, %c0_i32_0 : i32, i32
  }
  func.func @transform_3(%arg0: i32, %arg1: i32) -> (i32, i32, i32) {
    %c0_i32 = arith.constant 0 : i32
    %c0_i32_0 = arith.constant 0 : i32
    return %arg0, %arg1, %c0_i32 : i32, i32, i32
  }
  func.func @transform_4(%arg0: i32, %arg1: i32) -> (i32, i32, i32) {
    %c0_i32 = arith.constant 0 : i32
    %c0_i32_0 = arith.constant 0 : i32
    return %arg0, %c0_i32, %arg1 : i32, i32, i32
  }
  func.func @transform_5(%arg0: i32, %arg1: i32) -> (i32, i32, i32) {
    %c0_i32 = arith.constant 0 : i32
    %c0_i32_0 = arith.constant 0 : i32
    return %arg0, %c0_i32, %arg1 : i32, i32, i32
  }
  func.func @transform_6(%arg0: i32, %arg1: i32) -> (i32, i32, i32) {
    %c0_i32 = arith.constant 0 : i32
    %c0_i32_0 = arith.constant 0 : i32
    return %arg0, %c0_i32, %arg1 : i32, i32, i32
  }
}

</mosaic_0001>

<llo_original>
// kernel: tpu_custom_call.1
$region0: #{tpu_custom_call.1}
  #allocation0 [shape = 'u32[]', space=smem, size = 0x4, offset = 0x4, fixed_abs, tag = 'smem constant byte address 0x4 - core index']
  #allocation1 [shape = 'u32[72,128]{1,0:T(1,128)}', space=vmem, size = 0x9000, scoped, tag = 'internal scratch']
  %s0 = inlined_call_operand.vmem [shape: f32[1,128], index: 0, kind: input, shape index: {}]
  %s1 = inlined_call_operand.vmem [shape: f32[1,128], index: 1, kind: input, shape index: {}]
  %s2 = inlined_call_operand.vmem [shape: f32[8,128], index: 2, kind: input, shape index: {}]
  %s3 = inlined_call_operand.vmem [shape: f32[2,128,8], index: 3, kind: input, shape index: {}]
  %s4 = inlined_call_operand.hbm [shape: f32[2,1,128], index: 4, kind: output, shape index: {0}]
  %s5 = inlined_call_operand.hbm [shape: f32[2,2,128], index: 5, kind: output, shape index: {1}]
  %s6 = inlined_call_operand.hbm [shape: s32[2,2,128], index: 6, kind: output, shape index: {2}]
  %7 = xla_tuple %s4, %s5, %s6
  %s8 = sld [smem:[#allocation0]]
  $region65: #{tpu_custom_call.1} parent=0
    _
  %s10 = ssub.s32 1, %s8
  %s11 = scalar_select 0, %s10, %s8
  $region1: #{tpu_custom_call.1} parent=0
    #allocation2 [shape = 'u8[1024]{0}', space=vmem, size = 0x400, scoped, tag = 'output window, operand 0']
    #allocation3 [shape = 's32[2]{0}', space=sflag, size = 0x8, scoped, tag = 'scoped memory for tpu_custom_call.1']
    #allocation4 [shape = 'u8[2048]{0}', space=vmem, size = 0x800, scoped, tag = 'output window, operand 1']
    #allocation5 [shape = 's32[2]{0}', space=sflag, size = 0x8, scoped, tag = 'scoped memory for tpu_custom_call.1']
    #allocation6 [shape = 'u8[2048]{0}', space=vmem, size = 0x800, scoped, tag = 'output window, operand 2']
    %12 = vsyncpa [#allocation3], 0
    %s13 = scalar_lea.sflag [#allocation3], 1
    %14 = vsyncpa %s13, 0
    %15 = vsyncpa [#allocation5], 0
    %s16 = scalar_lea.sflag [#allocation5], 1
    %17 = vsyncpa %s16, 0
    loop: start=0, step=1, limit=4
    $region2: #{tpu_custom_call.1} parent=1 // loop_pre_header
      _
    $region3: #{tpu_custom_call.1} parent=1 // loop_header
      %s19 = sphi 0, %s23
      %p20 = scmp.ge.s32.totalorder %s19, 4
      %s26 = sphi 0, %s38
      %s27 = sphi 0, %s34
      %s28 = sphi 0, %s26
      %s29 = sphi 0, %s27
      %s30 = sphi 0, %s28
      %s31 = sphi 0, %s29
      %s39 = sphi 0, %s39
      %s41 = sphi 0, %s39
      %s42 = sphi 0, %s41
      %s56 = sphi 0, %s42
      %s60 = sphi 0, %s60
      %s62 = sphi 0, %s60
      %s63 = sphi 0, %s62
      %s77 = sphi 0, %s63
      %s81 = sphi 0, %s81
      %s83 = sphi 0, %s81
      %s84 = sphi 0, %s83
      %s98 = sphi 0, %s84
      %s106 = sphi 0, %s108
      %s109 = sphi 0, %s106
      %s110 = sphi 0, %s109
      %s126 = sphi 0, %s110
      %s134 = sphi 0, %s136
      %s137 = sphi 0, %s134
      %s138 = sphi 0, %s137
      %s154 = sphi 0, %s138
      %s162 = sphi 0, %s164
      %s165 = sphi 0, %s162
      %s166 = sphi 0, %s165
      %s182 = sphi 0, %s166
      %s190 = sphi 0, %s192
      %s193 = sphi 0, %s190
      %s194 = sphi 0, %s193
      %s210 = sphi 0, %s194
    $region4: #{tpu_custom_call.1} parent=1 // loop_header_branch
      %22 = sbr.rel (%p20) target = $region8
    $region5: #{tpu_custom_call.1} parent=1 // loop_body
      %s24 = ssub.s32 %s19, 1
      %s25 = ssub.s32 %s19, 2
      %s32 = sadd.s32 1, %s27
      %p33 = scmp.ge.s32.totalorder %s32, 1
      %s34 = scalar_select %p33, 0, %s32
      %s35 = sadd.s32 1, %s26
      %s36 = scalar_select %p33, %s35, %s26
      %p37 = scmp.ge.s32.totalorder %s36, 2
      %s38 = scalar_select %p37, 0, %s36
      %s40 = sadd.s32 %s39, 1
      %p43 = scmp.eq.s32.totalorder %s19, 1
      %p44 = scmp.ne.s32.totalorder %s39, %s41
      %p45 = scmp.eq.s32.totalorder %s19, 0
      %p46 = por %p44, %p45
      %p47 = scmp.ne.s32.totalorder %s39, %s41
      %p48 = scmp.eq.s32.totalorder %s24, 1
      %p49 = por %p47, %p48
      %p50 = scmp.ne.s32.totalorder %s41, %s42
      %p51 = scmp.eq.s32.totalorder %s24, 0
      %p52 = por %p50, %p51
      %p53 = scmp.ne.s32.totalorder %s41, %s42
      %p54 = scmp.eq.s32.totalorder %s25, 1
      %p55 = por %p53, %p54
      %p57 = scmp.ne.s32.totalorder %s42, %s56
      %p58 = scmp.eq.s32.totalorder %s25, 0
      %p59 = por %p57, %p58
      %s61 = sadd.s32 %s60, 1
      %p64 = scmp.eq.s32.totalorder %s19, 1
      %p65 = scmp.ne.s32.totalorder %s60, %s62
      %p66 = scmp.eq.s32.totalorder %s19, 0
      %p67 = por %p65, %p66
      %p68 = scmp.ne.s32.totalorder %s60, %s62
      %p69 = scmp.eq.s32.totalorder %s24, 1
      %p70 = por %p68, %p69
      %p71 = scmp.ne.s32.totalorder %s62, %s63
      %p72 = scmp.eq.s32.totalorder %s24, 0
      %p73 = por %p71, %p72
      %p74 = scmp.ne.s32.totalorder %s62, %s63
      %p75 = scmp.eq.s32.totalorder %s25, 1
      %p76 = por %p74, %p75
      %p78 = scmp.ne.s32.totalorder %s63, %s77
      %p79 = scmp.eq.s32.totalorder %s25, 0
      %p80 = por %p78, %p79
      %s82 = sadd.s32 %s81, 1
      %p85 = scmp.eq.s32.totalorder %s19, 1
      %p86 = scmp.ne.s32.totalorder %s81, %s83
      %p87 = scmp.eq.s32.totalorder %s19, 0
      %p88 = por %p86, %p87
      %p89 = scmp.ne.s32.totalorder %s81, %s83
      %p90 = scmp.eq.s32.totalorder %s24, 1
      %p91 = por %p89, %p90
      %p92 = scmp.ne.s32.totalorder %s83, %s84
      %p93 = scmp.eq.s32.totalorder %s24, 0
      %p94 = por %p92, %p93
      %p95 = scmp.ne.s32.totalorder %s83, %s84
      %p96 = scmp.eq.s32.totalorder %s25, 1
      %p97 = por %p95, %p96
      %p99 = scmp.ne.s32.totalorder %s84, %s98
      %p100 = scmp.eq.s32.totalorder %s25, 0
      %p101 = por %p99, %p100
      %s102 = ssub.s32 %s26, %s38
      %s103 = ssub.s32 %s27, %s34
      %s104 = sor.u32 %s102, %s103
      %p105 = scmp.eq.s32.totalorder %s104, 0
      %s107 = sadd.s32 %s106, 1
      %s108 = scalar_select %p105, %s106, %s107
      %p111 = pneg %p105
      %p112 = scmp.eq.s32.totalorder %s19, 1
      %p113 = por %p111, %p112
      %p114 = scmp.ne.s32.totalorder %s106, %s109
      %p115 = scmp.eq.s32.totalorder %s19, 0
      %p116 = por %p114, %p115
      %p117 = scmp.ne.s32.totalorder %s106, %s109
      %p118 = scmp.eq.s32.totalorder %s24, 1
      %p119 = por %p117, %p118
      %p120 = scmp.ne.s32.totalorder %s109, %s110
      %p121 = scmp.eq.s32.totalorder %s24, 0
      %p122 = por %p120, %p121
      %p123 = scmp.ne.s32.totalorder %s109, %s110
      %p124 = scmp.eq.s32.totalorder %s25, 1
      %p125 = por %p123, %p124
      %p127 = scmp.ne.s32.totalorder %s110, %s126
      %p128 = scmp.eq.s32.totalorder %s25, 0
      %p129 = por %p127, %p128
      %s130 = ssub.s32 %s26, %s38
      %s131 = ssub.s32 %s27, %s34
      %s132 = sor.u32 %s130, %s131
      %p133 = scmp.eq.s32.totalorder %s132, 0
      %s135 = sadd.s32 %s134, 1
      %s136 = scalar_select %p133, %s134, %s135
      %p139 = pneg %p133
      %p140 = scmp.eq.s32.totalorder %s19, 1
      %p141 = por %p139, %p140
      %p142 = scmp.ne.s32.totalorder %s134, %s137
      %p143 = scmp.eq.s32.totalorder %s19, 0
      %p144 = por %p142, %p143
      %p145 = scmp.ne.s32.totalorder %s134, %s137
      %p146 = scmp.eq.s32.totalorder %s24, 1
      %p147 = por %p145, %p146
      %p148 = scmp.ne.s32.totalorder %s137, %s138
      %p149 = scmp.eq.s32.totalorder %s24, 0
      %p150 = por %p148, %p149
      %p151 = scmp.ne.s32.totalorder %s137, %s138
      %p152 = scmp.eq.s32.totalorder %s25, 1
      %p153 = por %p151, %p152
      %p155 = scmp.ne.s32.totalorder %s138, %s154
      %p156 = scmp.eq.s32.totalorder %s25, 0
      %p157 = por %p155, %p156
      %s158 = ssub.s32 %s26, %s38
      %s159 = ssub.s32 %s27, %s34
      %s160 = sor.u32 %s158, %s159
      %p161 = scmp.eq.s32.totalorder %s160, 0
      %s163 = sadd.s32 %s162, 1
      %s164 = scalar_select %p161, %s162, %s163
      %p167 = pneg %p161
      %p168 = scmp.eq.s32.totalorder %s19, 1
      %p169 = por %p167, %p168
      %p170 = scmp.ne.s32.totalorder %s162, %s165
      %p171 = scmp.eq.s32.totalorder %s19, 0
      %p172 = por %p170, %p171
      %p173 = scmp.ne.s32.totalorder %s162, %s165
      %p174 = scmp.eq.s32.totalorder %s24, 1
      %p175 = por %p173, %p174
      %p176 = scmp.ne.s32.totalorder %s165, %s166
      %p177 = scmp.eq.s32.totalorder %s24, 0
      %p178 = por %p176, %p177
      %p179 = scmp.ne.s32.totalorder %s165, %s166
      %p180 = scmp.eq.s32.totalorder %s25, 1
      %p181 = por %p179, %p180
      %p183 = scmp.ne.s32.totalorder %s166, %s182
      %p184 = scmp.eq.s32.totalorder %s25, 0
      %p185 = por %p183, %p184
      %s186 = ssub.s32 %s26, %s38
      %s187 = ssub.s32 %s27, %s34
      %s188 = sor.u32 %s186, %s187
      %p189 = scmp.eq.s32.totalorder %s188, 0
      %s191 = sadd.s32 %s190, 1
      %s192 = scalar_select %p189, %s190, %s191
      %p195 = pneg %p189
      %p196 = scmp.eq.s32.totalorder %s19, 1
      %p197 = por %p195, %p196
      %p198 = scmp.ne.s32.totalorder %s190, %s193
      %p199 = scmp.eq.s32.totalorder %s19, 0
      %p200 = por %p198, %p199
      %p201 = scmp.ne.s32.totalorder %s190, %s193
      %p202 = scmp.eq.s32.totalorder %s24, 1
      %p203 = por %p201, %p202
      %p204 = scmp.ne.s32.totalorder %s193, %s194
      %p205 = scmp.eq.s32.totalorder %s24, 0
      %p206 = por %p204, %p205
      %p207 = scmp.ne.s32.totalorder %s193, %s194
      %p208 = scmp.eq.s32.totalorder %s25, 1
      %p209 = por %p207, %p208
      %p211 = scmp.ne.s32.totalorder %s194, %s210
      %p212 = scmp.eq.s32.totalorder %s25, 0
      %p213 = por %p211, %p212
      %p214 = scmp.le.s32.totalorder 1, %s19
      %p215 = scmp.lt.s32.totalorder %s19, 3
      %p216 = pnand %p214, %p215
      %p217 = pneg %p216
      // Predicated region
      $region9: #{tpu_custom_call.1} parent=5 // pred_check
        _
      $region10: #{tpu_custom_call.1} parent=5 // pred_check_branch
        %219 = sbr.rel (%p216) target = $region12
      $region11: #{tpu_custom_call.1} parent=5 // pred_region
        %s220 = ssub.s32 %s19, 1
        // Predicated region
        $region13: #{tpu_custom_call.1} parent=11 // pred_check
          %p221 = pneg %p52
        $region14: #{tpu_custom_call.1} parent=11 // pred_check_branch
          %223 = sbr.rel (%p221) target = $region16
        $region15: #{tpu_custom_call.1} parent=11 // pred_region
          _
        $region16: #{tpu_custom_call.1} parent=11 // pred_fallthru
          _
        // Predicated region
        $region17: #{tpu_custom_call.1} parent=11 // pred_check
          %p224 = pneg %p73
        $region18: #{tpu_custom_call.1} parent=11 // pred_check_branch
          %226 = sbr.rel (%p224) target = $region20
        $region19: #{tpu_custom_call.1} parent=11 // pred_region
          _
        $region20: #{tpu_custom_call.1} parent=11 // pred_fallthru
          _
        // Predicated region
        $region21: #{tpu_custom_call.1} parent=11 // pred_check
          %p227 = pneg %p94
        $region22: #{tpu_custom_call.1} parent=11 // pred_check_branch
          %229 = sbr.rel (%p227) target = $region24
        $region23: #{tpu_custom_call.1} parent=11 // pred_region
          _
        $region24: #{tpu_custom_call.1} parent=11 // pred_fallthru
          _
      $region12: #{tpu_custom_call.1} parent=5 // pred_fallthru
        _
      %p230 = scmp.lt.s32.totalorder %s19, 2
      // Predicated region
      $region25: #{tpu_custom_call.1} parent=5 // pred_check
        %p231 = pneg %p230
      $region26: #{tpu_custom_call.1} parent=5 // pred_check_branch
        %233 = sbr.rel (%p231) target = $region28
      $region27: #{tpu_custom_call.1} parent=5 // pred_region
        // Predicated region
        $region29: #{tpu_custom_call.1} parent=27 // pred_check
          %p234 = pneg %p116
        $region30: #{tpu_custom_call.1} parent=27 // pred_check_branch
          %236 = sbr.rel (%p234) target = $region32
        $region31: #{tpu_custom_call.1} parent=27 // pred_region
          %s237 = smul.u32 16, %s27
          %p238 = scmp.lt.s32.totalorder %s26, 1
          %s239 = scalar_select %p238, %s26, 1
          %p240 = scmp.lt.s32.totalorder %s237, 15
          %s241 = scalar_select %p240, %s237, 15
          %s242 = smul.addr %s239, 16
          %s243 = sadd.s32 %s241, %s242
          %s244 = smul.addr %s243, 8
          %s245 = scalar_lea.vmem %s3, %s244
          %s246 = smul.u32 16, %s27
        $region32: #{tpu_custom_call.1} parent=27 // pred_fallthru
          _
      $region28: #{tpu_custom_call.1} parent=5 // pred_fallthru
        _
      %p247 = scmp.le.s32.totalorder 1, %s19
      %p248 = scmp.lt.s32.totalorder %s19, 3
      %p249 = pnand %p247, %p248
      %p250 = pneg %p249
      // Predicated region
      $region33: #{tpu_custom_call.1} parent=5 // pred_check
        _
      $region34: #{tpu_custom_call.1} parent=5 // pred_check_branch
        %252 = sbr.rel (%p249) target = $region36
      $region35: #{tpu_custom_call.1} parent=5 // pred_region
        %s253 = ssub.s32 %s19, 1
        %p254 = pneg %p52
        %p255 = pneg %p49
        %p256 = pneg %p73
        %p257 = pneg %p70
        %p258 = pneg %p94
        %p259 = pneg %p91
        %s260 = smul.u32 16, %s29
        %p261 = scmp.lt.s32.totalorder %s28, 1
        %s262 = scalar_select %p261, %s28, 1
        %p263 = scmp.lt.s32.totalorder %s260, 15
        %s264 = scalar_select %p263, %s260, 15
        %s265 = smul.addr %s262, 16
        %s266 = sadd.s32 %s264, %s265
        %s267 = smul.addr %s266, 8
        %s268 = scalar_lea.vmem %s3, %s267
        %p269 = pneg %p122
        %p270 = pneg %p119
        %p271 = pneg %p150
        %p272 = pneg %p147
        %s273 = sand.u32 %s137, 1
        %s274 = scalar_lea.sflag [#allocation3], %s273
        %s275 = sand.u32 %s137, 1
        %s276 = scalar_lea.vmem [#allocation2], %s275
        %p277 = pneg %p178
        %p278 = pneg %p175
        %s279 = sand.u32 %s24, 1
        %s280 = scalar_lea.sflag [#allocation5], %s279
        %s281 = sand.u32 %s165, 1
        %s282 = smul.addr %s281, 2
        %s283 = scalar_lea.vmem [#allocation4], %s282
        %p284 = pneg %p206
        %p285 = pneg %p203
        %s286 = sand.u32 %s24, 1
        %s287 = scalar_lea.sflag [#allocation5], %s286
        %s288 = sand.u32 %s193, 1
        %s289 = smul.addr %s288, 2
        %s290 = scalar_lea.vmem [#allocation6], %s289
        %s291 = smul.u32 16, %s29
        %p292 = scmp.lt.s32.totalorder %s28, 1
        %s293 = scalar_select %p292, %s28, 1
        %p294 = scmp.lt.s32.totalorder %s291, 15
        %s295 = scalar_select %p294, %s291, 15
        %s296 = smul.addr %s293, 16
        %s297 = sadd.s32 %s295, %s296
        %s298 = smul.addr %s297, 8
        %s299 = scalar_lea.vmem %s3, %s298
        %s300 = smul.u32 16, %s29
        %v301 = vld [vmem:[%s299] sm:$0xff]
        %v302 = vld [vmem:[%s299 + $0x8] sm:$0xff]
        %v303 = vld [vmem:[%s299 + $0x10] sm:$0xff]
        %v304 = vld [vmem:[%s299 + $0x18] sm:$0xff]
        %v305 = vld [vmem:[%s299 + $0x20] sm:$0xff]
        %v306 = vld [vmem:[%s299 + $0x28] sm:$0xff]
        %v307 = vld [vmem:[%s299 + $0x30] sm:$0xff]
        %v308 = vld [vmem:[%s299 + $0x38] sm:$0xff]
        %v309 = vld [vmem:[%s299 + $0x40] sm:$0xff]
        %v310 = vld [vmem:[%s299 + $0x48] sm:$0xff]
        %v311 = vld [vmem:[%s299 + $0x50] sm:$0xff]
        %v312 = vld [vmem:[%s299 + $0x58] sm:$0xff]
        %v313 = vld [vmem:[%s299 + $0x60] sm:$0xff]
        %v314 = vld [vmem:[%s299 + $0x68] sm:$0xff]
        %v315 = vld [vmem:[%s299 + $0x70] sm:$0xff]
        %v316 = vld [vmem:[%s299 + $0x78] sm:$0xff]
        %v317 = vld [vmem:[%s2] sm:$0xff]
        %v318 = vld [vmem:[%s1] sm:$0x1]
        %v319 = vld [vmem:[%s0] sm:$0x1]
        %vm320 = vcmask 64512
        %v322 = vsel %vm320, %v301, 0
        %v325 = vsel %vm320, %v302, 0
        %v328 = vsel %vm320, %v303, 0
        %v331 = vsel %vm320, %v304, 0
        %v334 = vsel %vm320, %v305, 0
        %v337 = vsel %vm320, %v306, 0
        %v340 = vsel %vm320, %v307, 0
        %v343 = vsel %vm320, %v308, 0
        %v346 = vsel %vm320, %v309, 0
        %v349 = vsel %vm320, %v310, 0
        %v352 = vsel %vm320, %v311, 0
        %v355 = vsel %vm320, %v312, 0
        %v358 = vsel %vm320, %v313, 0
        %v361 = vsel %vm320, %v314, 0
        %v364 = vsel %vm320, %v315, 0
        %v367 = vsel %vm320, %v316, 0
        %369 = vmatpush.msra.mxu0 0.0
        %370 = vmatpush.msra.mxu0 0.0
        %371 = vmatpush.msra.mxu0 0.0
        %372 = vmatpush.msra.mxu0 0.0
        %373 = vmatpush.msra.mxu0 0.0
        %374 = vmatpush.msra.mxu0 0.0
        %375 = vmatpush.msra.mxu0 0.0
        %376 = vmatpush.msra.mxu0 0.0
        %377 = vmatpush.msra.mxu0 0.0
        %378 = vmatpush.msra.mxu0 0.0
        %379 = vmatpush.msra.mxu0 0.0
        %380 = vmatpush.msra.mxu0 0.0
        %381 = vmatpush.msra.mxu0 0.0
        %382 = vmatpush.msra.mxu0 0.0
        %383 = vmatpush.msra.mxu0 0.0
        %384 = vmatpush.msra.mxu0 %v317
        %385 = vmatmul.f32.gmra.mxu0 %v322
        %v386 = vpop.f32.mrf.mxu0
        %v387 = vadd.f32 0.0, %v386
        %388 = vmatmul.f32.gmra.mxu0 %v325
        %v389 = vpop.f32.mrf.mxu0
        %v390 = vadd.f32 0.0, %v389
        %391 = vmatmul.f32.gmra.mxu0 %v328
        %v392 = vpop.f32.mrf.mxu0
        %v393 = vadd.f32 0.0, %v392
        %394 = vmatmul.f32.gmra.mxu0 %v331
        %v395 = vpop.f32.mrf.mxu0
        %v396 = vadd.f32 0.0, %v395
        %397 = vmatmul.f32.gmra.mxu0 %v334
        %v398 = vpop.f32.mrf.mxu0
        %v399 = vadd.f32 0.0, %v398
        %400 = vmatmul.f32.gmra.mxu0 %v337
        %v401 = vpop.f32.mrf.mxu0
        %v402 = vadd.f32 0.0, %v401
        %403 = vmatmul.f32.gmra.mxu0 %v340
        %v404 = vpop.f32.mrf.mxu0
        %v405 = vadd.f32 0.0, %v404
        %406 = vmatmul.f32.gmra.mxu0 %v343
        %v407 = vpop.f32.mrf.mxu0
        %v408 = vadd.f32 0.0, %v407
        %409 = vmatmul.f32.gmra.mxu0 %v346
        %v410 = vpop.f32.mrf.mxu0
        %v411 = vadd.f32 0.0, %v410
        %412 = vmatmul.f32.gmra.mxu0 %v349
        %v413 = vpop.f32.mrf.mxu0
        %v414 = vadd.f32 0.0, %v413
        %415 = vmatmul.f32.gmra.mxu0 %v352
        %v416 = vpop.f32.mrf.mxu0
        %v417 = vadd.f32 0.0, %v416
        %418 = vmatmul.f32.gmra.mxu0 %v355
        %v419 = vpop.f32.mrf.mxu0
        %v420 = vadd.f32 0.0, %v419
        %421 = vmatmul.f32.gmra.mxu0 %v358
        %v422 = vpop.f32.mrf.mxu0
        %v423 = vadd.f32 0.0, %v422
        %424 = vmatmul.f32.gmra.mxu0 %v361
        %v425 = vpop.f32.mrf.mxu0
        %v426 = vadd.f32 0.0, %v425
        %427 = vmatmul.f32.gmra.mxu0 %v364
        %v428 = vpop.f32.mrf.mxu0
        %v429 = vadd.f32 0.0, %v428
        %430 = vmatmul.f32.gmra.mxu0 %v367
        %v431 = vpop.f32.mrf.mxu0
        %v432 = vadd.f32 0.0, %v431
        %433 = vdwg.mxu0
        %v434 = vmul.f32 %v301, %v301
        %v435 = vmul.f32 %v302, %v302
        %v436 = vmul.f32 %v303, %v303
        %v437 = vmul.f32 %v304, %v304
        %v438 = vmul.f32 %v305, %v305
        %v439 = vmul.f32 %v306, %v306
        %v440 = vmul.f32 %v307, %v307
        %v441 = vmul.f32 %v308, %v308
        %v442 = vmul.f32 %v309, %v309
        %v443 = vmul.f32 %v310, %v310
        %v444 = vmul.f32 %v311, %v311
        %v445 = vmul.f32 %v312, %v312
        %v446 = vmul.f32 %v313, %v313
        %v447 = vmul.f32 %v314, %v314
        %v448 = vmul.f32 %v315, %v315
        %v449 = vmul.f32 %v316, %v316
        %v450 = vsel %vm320, %v434, 0.0
        %451 = vadd.xlane.f32.xlu0 %v450
        %v452 = vpop.xlane.xlu0 %451
        %v453 = vsel %vm320, %v435, 0.0
        %454 = vadd.xlane.f32.xlu0 %v453
        %v455 = vpop.xlane.xlu0 %454
        %v456 = vsel %vm320, %v436, 0.0
        %457 = vadd.xlane.f32.xlu0 %v456
        %v458 = vpop.xlane.xlu0 %457
        %v459 = vsel %vm320, %v437, 0.0
        %460 = vadd.xlane.f32.xlu0 %v459
        %v461 = vpop.xlane.xlu0 %460
        %v462 = vsel %vm320, %v438, 0.0
        %463 = vadd.xlane.f32.xlu0 %v462
        %v464 = vpop.xlane.xlu0 %463
        %v465 = vsel %vm320, %v439, 0.0
        %466 = vadd.xlane.f32.xlu0 %v465
        %v467 = vpop.xlane.xlu0 %466
        %v468 = vsel %vm320, %v440, 0.0
        %469 = vadd.xlane.f32.xlu0 %v468
        %v470 = vpop.xlane.xlu0 %469
        %v471 = vsel %vm320, %v441, 0.0
        %472 = vadd.xlane.f32.xlu0 %v471
        %v473 = vpop.xlane.xlu0 %472
        %v474 = vsel %vm320, %v442, 0.0
        %475 = vadd.xlane.f32.xlu0 %v474
        %v476 = vpop.xlane.xlu0 %475
        %v477 = vsel %vm320, %v443, 0.0
        %478 = vadd.xlane.f32.xlu0 %v477
        %v479 = vpop.xlane.xlu0 %478
        %v480 = vsel %vm320, %v444, 0.0
        %481 = vadd.xlane.f32.xlu0 %v480
        %v482 = vpop.xlane.xlu0 %481
        %v483 = vsel %vm320, %v445, 0.0
        %484 = vadd.xlane.f32.xlu0 %v483
        %v485 = vpop.xlane.xlu0 %484
        %v486 = vsel %vm320, %v446, 0.0
        %487 = vadd.xlane.f32.xlu0 %v486
        %v488 = vpop.xlane.xlu0 %487
        %v489 = vsel %vm320, %v447, 0.0
        %490 = vadd.xlane.f32.xlu0 %v489
        %v491 = vpop.xlane.xlu0 %490
        %v492 = vsel %vm320, %v448, 0.0
        %493 = vadd.xlane.f32.xlu0 %v492
        %v494 = vpop.xlane.xlu0 %493
        %v495 = vsel %vm320, %v449, 0.0
        %496 = vadd.xlane.f32.xlu0 %v495
        %v497 = vpop.xlane.xlu0 %496
        %v498 = vmul.f32 %v387, 2.0
        %v499 = vmul.f32 %v390, 2.0
        %v500 = vmul.f32 %v393, 2.0
        %v501 = vmul.f32 %v396, 2.0
        %v502 = vmul.f32 %v399, 2.0
        %v503 = vmul.f32 %v402, 2.0
        %v504 = vmul.f32 %v405, 2.0
        %v505 = vmul.f32 %v408, 2.0
        %v506 = vmul.f32 %v411, 2.0
        %v507 = vmul.f32 %v414, 2.0
        %v508 = vmul.f32 %v417, 2.0
        %v509 = vmul.f32 %v420, 2.0
        %v510 = vmul.f32 %v423, 2.0
        %v511 = vmul.f32 %v426, 2.0
        %v512 = vmul.f32 %v429, 2.0
        %v513 = vmul.f32 %v432, 2.0
        %v514 = vsub.f32 %v452, %v498
        %v515 = vsub.f32 %v455, %v499
        %v516 = vsub.f32 %v458, %v500
        %v517 = vsub.f32 %v461, %v501
        %v518 = vsub.f32 %v464, %v502
        %v519 = vsub.f32 %v467, %v503
        %v520 = vsub.f32 %v470, %v504
        %v521 = vsub.f32 %v473, %v505
        %v522 = vsub.f32 %v476, %v506
        %v523 = vsub.f32 %v479, %v507
        %v524 = vsub.f32 %v482, %v508
        %v525 = vsub.f32 %v485, %v509
        %v526 = vsub.f32 %v488, %v510
        %v527 = vsub.f32 %v491, %v511
        %v528 = vsub.f32 %v494, %v512
        %v529 = vsub.f32 %v497, %v513
        %v531 = vperm.slane %v318, 0
        %v533 = vadd.f32 %v514, %v531
        %v534 = vadd.f32 %v515, %v531
        %v535 = vadd.f32 %v516, %v531
        %v536 = vadd.f32 %v517, %v531
        %v537 = vadd.f32 %v518, %v531
        %v538 = vadd.f32 %v519, %v531
        %v539 = vadd.f32 %v520, %v531
        %v540 = vadd.f32 %v521, %v531
        %v541 = vadd.f32 %v522, %v531
        %v542 = vadd.f32 %v523, %v531
        %v543 = vadd.f32 %v524, %v531
        %v544 = vadd.f32 %v525, %v531
        %v545 = vadd.f32 %v526, %v531
        %v546 = vadd.f32 %v527, %v531
        %v547 = vadd.f32 %v528, %v531
        %v548 = vadd.f32 %v529, %v531
        %v549 = vmax.f32 %v533, 0.0
        %v550 = vmax.f32 %v534, 0.0
        %v551 = vmax.f32 %v535, 0.0
        %v552 = vmax.f32 %v536, 0.0
        %v553 = vmax.f32 %v537, 0.0
        %v554 = vmax.f32 %v538, 0.0
        %v555 = vmax.f32 %v539, 0.0
        %v556 = vmax.f32 %v540, 0.0
        %v557 = vmax.f32 %v541, 0.0
        %v558 = vmax.f32 %v542, 0.0
        %v559 = vmax.f32 %v543, 0.0
        %v560 = vmax.f32 %v544, 0.0
        %v561 = vmax.f32 %v545, 0.0
        %v562 = vmax.f32 %v546, 0.0
        %v563 = vmax.f32 %v547, 0.0
        %v564 = vmax.f32 %v548, 0.0
        %v565 = vlaneseq
        %v566 = vand.u32 %v565, 127
        %567 = vmin.xlane.f32.xlu0 %v549
        %v568 = vpop.xlane.xlu0 %567
        %569 = vmin.xlane.f32.xlu0 %v550
        %v570 = vpop.xlane.xlu0 %569
        %571 = vmin.xlane.f32.xlu0 %v551
        %v572 = vpop.xlane.xlu0 %571
        %573 = vmin.xlane.f32.xlu0 %v552
        %v574 = vpop.xlane.xlu0 %573
        %575 = vmin.xlane.f32.xlu0 %v553
        %v576 = vpop.xlane.xlu0 %575
        %577 = vmin.xlane.f32.xlu0 %v554
        %v578 = vpop.xlane.xlu0 %577
        %579 = vmin.xlane.f32.xlu0 %v555
        %v580 = vpop.xlane.xlu0 %579
        %581 = vmin.xlane.f32.xlu0 %v556
        %v582 = vpop.xlane.xlu0 %581
        %583 = vmin.xlane.f32.xlu0 %v557
        %v584 = vpop.xlane.xlu0 %583
        %585 = vmin.xlane.f32.xlu0 %v558
        %v586 = vpop.xlane.xlu0 %585
        %587 = vmin.xlane.f32.xlu0 %v559
        %v588 = vpop.xlane.xlu0 %587
        %589 = vmin.xlane.f32.xlu0 %v560
        %v590 = vpop.xlane.xlu0 %589
        %591 = vmin.xlane.f32.xlu0 %v561
        %v592 = vpop.xlane.xlu0 %591
        %593 = vmin.xlane.f32.xlu0 %v562
        %v594 = vpop.xlane.xlu0 %593
        %595 = vmin.xlane.f32.xlu0 %v563
        %v596 = vpop.xlane.xlu0 %595
        %597 = vmin.xlane.f32.xlu0 %v564
        %v598 = vpop.xlane.xlu0 %597
        %vm599 = vcmp.eq.f32.partialorder %v549, %v568
        %vm600 = vcmp.eq.f32.partialorder %v550, %v570
        %vm601 = vcmp.eq.f32.partialorder %v551, %v572
        %vm602 = vcmp.eq.f32.partialorder %v552, %v574
        %vm603 = vcmp.eq.f32.partialorder %v553, %v576
        %vm604 = vcmp.eq.f32.partialorder %v554, %v578
        %vm605 = vcmp.eq.f32.partialorder %v555, %v580
        %vm606 = vcmp.eq.f32.partialorder %v556, %v582
        %vm607 = vcmp.eq.f32.partialorder %v557, %v584
        %vm608 = vcmp.eq.f32.partialorder %v558, %v586
        %vm609 = vcmp.eq.f32.partialorder %v559, %v588
        %vm610 = vcmp.eq.f32.partialorder %v560, %v590
        %vm611 = vcmp.eq.f32.partialorder %v561, %v592
        %vm612 = vcmp.eq.f32.partialorder %v562, %v594
        %vm613 = vcmp.eq.f32.partialorder %v563, %v596
        %vm614 = vcmp.eq.f32.partialorder %v564, %v598
        %v615 = vsel %vm599, %v566, 128
        %v616 = vsel %vm600, %v566, 128
        %v617 = vsel %vm601, %v566, 128
        %v618 = vsel %vm602, %v566, 128
        %v619 = vsel %vm603, %v566, 128
        %v620 = vsel %vm604, %v566, 128
        %v621 = vsel %vm605, %v566, 128
        %v622 = vsel %vm606, %v566, 128
        %v623 = vsel %vm607, %v566, 128
        %v624 = vsel %vm608, %v566, 128
        %v625 = vsel %vm609, %v566, 128
        %v626 = vsel %vm610, %v566, 128
        %v627 = vsel %vm611, %v566, 128
        %v628 = vsel %vm612, %v566, 128
        %v629 = vsel %vm613, %v566, 128
        %v630 = vsel %vm614, %v566, 128
        %v631 = vand.u32 %v615, 65535
        %v632 = vshra.s32 %v615, 16
        %v633 = vcvt.s32.f32 %v631
        %v634 = vcvt.s32.f32 %v632
        %635 = vmin.xlane.f32.xlu0 %v634
        %v636 = vpop.xlane.xlu0 %635
        %vm637 = vcmp.eq.f32.partialorder %v634, %v636
        %v638 = vsel %vm637, %v633, inf
        %639 = vmin.xlane.f32.xlu0 %v638
        %v640 = vpop.xlane.xlu0 %639
        %v641 = vcvt.f32.s32 %v640
        %v642 = vcvt.f32.s32 %v636
        %v643 = vshll.u32 %v642, 16
        %v644 = vadd.s32 %v643, %v641
        %v645 = vand.u32 %v616, 65535
        %v646 = vshra.s32 %v616, 16
        %v647 = vcvt.s32.f32 %v645
        %v648 = vcvt.s32.f32 %v646
        %649 = vmin.xlane.f32.xlu0 %v648
        %v650 = vpop.xlane.xlu0 %649
        %vm651 = vcmp.eq.f32.partialorder %v648, %v650
        %v652 = vsel %vm651, %v647, inf
        %653 = vmin.xlane.f32.xlu0 %v652
        %v654 = vpop.xlane.xlu0 %653
        %v655 = vcvt.f32.s32 %v654
        %v656 = vcvt.f32.s32 %v650
        %v657 = vshll.u32 %v656, 16
        %v658 = vadd.s32 %v657, %v655
        %v659 = vand.u32 %v617, 65535
        %v660 = vshra.s32 %v617, 16
        %v661 = vcvt.s32.f32 %v659
        %v662 = vcvt.s32.f32 %v660
        %663 = vmin.xlane.f32.xlu0 %v662
        %v664 = vpop.xlane.xlu0 %663
        %vm665 = vcmp.eq.f32.partialorder %v662, %v664
        %v666 = vsel %vm665, %v661, inf
        %667 = vmin.xlane.f32.xlu0 %v666
        %v668 = vpop.xlane.xlu0 %667
        %v669 = vcvt.f32.s32 %v668
        %v670 = vcvt.f32.s32 %v664
        %v671 = vshll.u32 %v670, 16
        %v672 = vadd.s32 %v671, %v669
        %v673 = vand.u32 %v618, 65535
        %v674 = vshra.s32 %v618, 16
        %v675 = vcvt.s32.f32 %v673
        %v676 = vcvt.s32.f32 %v674
        %677 = vmin.xlane.f32.xlu0 %v676
        %v678 = vpop.xlane.xlu0 %677
        %vm679 = vcmp.eq.f32.partialorder %v676, %v678
        %v680 = vsel %vm679, %v675, inf
        %681 = vmin.xlane.f32.xlu0 %v680
        %v682 = vpop.xlane.xlu0 %681
        %v683 = vcvt.f32.s32 %v682
        %v684 = vcvt.f32.s32 %v678
        %v685 = vshll.u32 %v684, 16
        %v686 = vadd.s32 %v685, %v683
        %v687 = vand.u32 %v619, 65535
        %v688 = vshra.s32 %v619, 16
        %v689 = vcvt.s32.f32 %v687
        %v690 = vcvt.s32.f32 %v688
        %691 = vmin.xlane.f32.xlu0 %v690
        %v692 = vpop.xlane.xlu0 %691
        %vm693 = vcmp.eq.f32.partialorder %v690, %v692
        %v694 = vsel %vm693, %v689, inf
        %695 = vmin.xlane.f32.xlu0 %v694
        %v696 = vpop.xlane.xlu0 %695
        %v697 = vcvt.f32.s32 %v696
        %v698 = vcvt.f32.s32 %v692
        %v699 = vshll.u32 %v698, 16
        %v700 = vadd.s32 %v699, %v697
        %v701 = vand.u32 %v620, 65535
        %v702 = vshra.s32 %v620, 16
        %v703 = vcvt.s32.f32 %v701
        %v704 = vcvt.s32.f32 %v702
        %705 = vmin.xlane.f32.xlu0 %v704
        %v706 = vpop.xlane.xlu0 %705
        %vm707 = vcmp.eq.f32.partialorder %v704, %v706
        %v708 = vsel %vm707, %v703, inf
        %709 = vmin.xlane.f32.xlu0 %v708
        %v710 = vpop.xlane.xlu0 %709
        %v711 = vcvt.f32.s32 %v710
        %v712 = vcvt.f32.s32 %v706
        %v713 = vshll.u32 %v712, 16
        %v714 = vadd.s32 %v713, %v711
        %v715 = vand.u32 %v621, 65535
        %v716 = vshra.s32 %v621, 16
        %v717 = vcvt.s32.f32 %v715
        %v718 = vcvt.s32.f32 %v716
        %719 = vmin.xlane.f32.xlu0 %v718
        %v720 = vpop.xlane.xlu0 %719
        %vm721 = vcmp.eq.f32.partialorder %v718, %v720
        %v722 = vsel %vm721, %v717, inf
        %723 = vmin.xlane.f32.xlu0 %v722
        %v724 = vpop.xlane.xlu0 %723
        %v725 = vcvt.f32.s32 %v724
        %v726 = vcvt.f32.s32 %v720
        %v727 = vshll.u32 %v726, 16
        %v728 = vadd.s32 %v727, %v725
        %v729 = vand.u32 %v622, 65535
        %v730 = vshra.s32 %v622, 16
        %v731 = vcvt.s32.f32 %v729
        %v732 = vcvt.s32.f32 %v730
        %733 = vmin.xlane.f32.xlu0 %v732
        %v734 = vpop.xlane.xlu0 %733
        %vm735 = vcmp.eq.f32.partialorder %v732, %v734
        %v736 = vsel %vm735, %v731, inf
        %737 = vmin.xlane.f32.xlu0 %v736
        %v738 = vpop.xlane.xlu0 %737
        %v739 = vcvt.f32.s32 %v738
        %v740 = vcvt.f32.s32 %v734
        %v741 = vshll.u32 %v740, 16
        %v742 = vadd.s32 %v741, %v739
        %v743 = vand.u32 %v623, 65535
        %v744 = vshra.s32 %v623, 16
        %v745 = vcvt.s32.f32 %v743
        %v746 = vcvt.s32.f32 %v744
        %747 = vmin.xlane.f32.xlu0 %v746
        %v748 = vpop.xlane.xlu0 %747
        %vm749 = vcmp.eq.f32.partialorder %v746, %v748
        %v750 = vsel %vm749, %v745, inf
        %751 = vmin.xlane.f32.xlu0 %v750
        %v752 = vpop.xlane.xlu0 %751
        %v753 = vcvt.f32.s32 %v752
        %v754 = vcvt.f32.s32 %v748
        %v755 = vshll.u32 %v754, 16
        %v756 = vadd.s32 %v755, %v753
        %v757 = vand.u32 %v624, 65535
        %v758 = vshra.s32 %v624, 16
        %v759 = vcvt.s32.f32 %v757
        %v760 = vcvt.s32.f32 %v758
        %761 = vmin.xlane.f32.xlu0 %v760
        %v762 = vpop.xlane.xlu0 %761
        %vm763 = vcmp.eq.f32.partialorder %v760, %v762
        %v764 = vsel %vm763, %v759, inf
        %765 = vmin.xlane.f32.xlu0 %v764
        %v766 = vpop.xlane.xlu0 %765
        %v767 = vcvt.f32.s32 %v766
        %v768 = vcvt.f32.s32 %v762
        %v769 = vshll.u32 %v768, 16
        %v770 = vadd.s32 %v769, %v767
        %v771 = vand.u32 %v625, 65535
        %v772 = vshra.s32 %v625, 16
        %v773 = vcvt.s32.f32 %v771
        %v774 = vcvt.s32.f32 %v772
        %775 = vmin.xlane.f32.xlu0 %v774
        %v776 = vpop.xlane.xlu0 %775
        %vm777 = vcmp.eq.f32.partialorder %v774, %v776
        %v778 = vsel %vm777, %v773, inf
        %779 = vmin.xlane.f32.xlu0 %v778
        %v780 = vpop.xlane.xlu0 %779
        %v781 = vcvt.f32.s32 %v780
        %v782 = vcvt.f32.s32 %v776
        %v783 = vshll.u32 %v782, 16
        %v784 = vadd.s32 %v783, %v781
        %v785 = vand.u32 %v626, 65535
        %v786 = vshra.s32 %v626, 16
        %v787 = vcvt.s32.f32 %v785
        %v788 = vcvt.s32.f32 %v786
        %789 = vmin.xlane.f32.xlu0 %v788
        %v790 = vpop.xlane.xlu0 %789
        %vm791 = vcmp.eq.f32.partialorder %v788, %v790
        %v792 = vsel %vm791, %v787, inf
        %793 = vmin.xlane.f32.xlu0 %v792
        %v794 = vpop.xlane.xlu0 %793
        %v795 = vcvt.f32.s32 %v794
        %v796 = vcvt.f32.s32 %v790
        %v797 = vshll.u32 %v796, 16
        %v798 = vadd.s32 %v797, %v795
        %v799 = vand.u32 %v627, 65535
        %v800 = vshra.s32 %v627, 16
        %v801 = vcvt.s32.f32 %v799
        %v802 = vcvt.s32.f32 %v800
        %803 = vmin.xlane.f32.xlu0 %v802
        %v804 = vpop.xlane.xlu0 %803
        %vm805 = vcmp.eq.f32.partialorder %v802, %v804
        %v806 = vsel %vm805, %v801, inf
        %807 = vmin.xlane.f32.xlu0 %v806
        %v808 = vpop.xlane.xlu0 %807
        %v809 = vcvt.f32.s32 %v808
        %v810 = vcvt.f32.s32 %v804
        %v811 = vshll.u32 %v810, 16
        %v812 = vadd.s32 %v811, %v809
        %v813 = vand.u32 %v628, 65535
        %v814 = vshra.s32 %v628, 16
        %v815 = vcvt.s32.f32 %v813
        %v816 = vcvt.s32.f32 %v814
        %817 = vmin.xlane.f32.xlu0 %v816
        %v818 = vpop.xlane.xlu0 %817
        %vm819 = vcmp.eq.f32.partialorder %v816, %v818
        %v820 = vsel %vm819, %v815, inf
        %821 = vmin.xlane.f32.xlu0 %v820
        %v822 = vpop.xlane.xlu0 %821
        %v823 = vcvt.f32.s32 %v822
        %v824 = vcvt.f32.s32 %v818
        %v825 = vshll.u32 %v824, 16
        %v826 = vadd.s32 %v825, %v823
        %v827 = vand.u32 %v629, 65535
        %v828 = vshra.s32 %v629, 16
        %v829 = vcvt.s32.f32 %v827
        %v830 = vcvt.s32.f32 %v828
        %831 = vmin.xlane.f32.xlu0 %v830
        %v832 = vpop.xlane.xlu0 %831
        %vm833 = vcmp.eq.f32.partialorder %v830, %v832
        %v834 = vsel %vm833, %v829, inf
        %835 = vmin.xlane.f32.xlu0 %v834
        %v836 = vpop.xlane.xlu0 %835
        %v837 = vcvt.f32.s32 %v836
        %v838 = vcvt.f32.s32 %v832
        %v839 = vshll.u32 %v838, 16
        %v840 = vadd.s32 %v839, %v837
        %v841 = vand.u32 %v630, 65535
        %v842 = vshra.s32 %v630, 16
        %v843 = vcvt.s32.f32 %v841
        %v844 = vcvt.s32.f32 %v842
        %845 = vmin.xlane.f32.xlu0 %v844
        %v846 = vpop.xlane.xlu0 %845
        %vm847 = vcmp.eq.f32.partialorder %v844, %v846
        %v848 = vsel %vm847, %v843, inf
        %849 = vmin.xlane.f32.xlu0 %v848
        %v850 = vpop.xlane.xlu0 %849
        %v851 = vcvt.f32.s32 %v850
        %v852 = vcvt.f32.s32 %v846
        %v853 = vshll.u32 %v852, 16
        %v854 = vadd.s32 %v853, %v851
        %vm855 = vcmp.eq.s32.totalorder %v566, %v644
        %vm856 = vcmp.eq.s32.totalorder %v566, %v658
        %vm857 = vcmp.eq.s32.totalorder %v566, %v672
        %vm858 = vcmp.eq.s32.totalorder %v566, %v686
        %vm859 = vcmp.eq.s32.totalorder %v566, %v700
        %vm860 = vcmp.eq.s32.totalorder %v566, %v714
        %vm861 = vcmp.eq.s32.totalorder %v566, %v728
        %vm862 = vcmp.eq.s32.totalorder %v566, %v742
        %vm863 = vcmp.eq.s32.totalorder %v566, %v756
        %vm864 = vcmp.eq.s32.totalorder %v566, %v770
        %vm865 = vcmp.eq.s32.totalorder %v566, %v784
        %vm866 = vcmp.eq.s32.totalorder %v566, %v798
        %vm867 = vcmp.eq.s32.totalorder %v566, %v812
        %vm868 = vcmp.eq.s32.totalorder %v566, %v826
        %vm869 = vcmp.eq.s32.totalorder %v566, %v840
        %vm870 = vcmp.eq.s32.totalorder %v566, %v854
        %v871 = vrsqrt.pop %v568
        %v872 = vmul.f32 %v871, %v568
        %v873 = vmul.f32 %v872, %v871
        %v874 = vmul.f32 0.5, %v873
        %v875 = vsub.f32 1.5, %v874
        %v876 = vmul.f32 %v871, %v875
        %v877 = vmul.f32 %v568, %v876
        %vm878 = vcmp.eq.f32.partialorder %v568, inf
        %v879 = vsel %vm878, %v568, %v877
        %vm880 = vcmp.eq.f32.partialorder %v568, 0.0
        %v881 = vand.u32 %v568, 2147483648
        %v882 = vsel %vm880, %v881, %v879
        %v883 = vrsqrt.pop %v570
        %v884 = vmul.f32 %v883, %v570
        %v885 = vmul.f32 %v884, %v883
        %v886 = vmul.f32 0.5, %v885
        %v887 = vsub.f32 1.5, %v886
        %v888 = vmul.f32 %v883, %v887
        %v889 = vmul.f32 %v570, %v888
        %vm890 = vcmp.eq.f32.partialorder %v570, inf
        %v891 = vsel %vm890, %v570, %v889
        %vm892 = vcmp.eq.f32.partialorder %v570, 0.0
        %v893 = vand.u32 %v570, 2147483648
        %v894 = vsel %vm892, %v893, %v891
        %v895 = vrsqrt.pop %v572
        %v896 = vmul.f32 %v895, %v572
        %v897 = vmul.f32 %v896, %v895
        %v898 = vmul.f32 0.5, %v897
        %v899 = vsub.f32 1.5, %v898
        %v900 = vmul.f32 %v895, %v899
        %v901 = vmul.f32 %v572, %v900
        %vm902 = vcmp.eq.f32.partialorder %v572, inf
        %v903 = vsel %vm902, %v572, %v901
        %vm904 = vcmp.eq.f32.partialorder %v572, 0.0
        %v905 = vand.u32 %v572, 2147483648
        %v906 = vsel %vm904, %v905, %v903
        %v907 = vrsqrt.pop %v574
        %v908 = vmul.f32 %v907, %v574
        %v909 = vmul.f32 %v908, %v907
        %v910 = vmul.f32 0.5, %v909
        %v911 = vsub.f32 1.5, %v910
        %v912 = vmul.f32 %v907, %v911
        %v913 = vmul.f32 %v574, %v912
        %vm914 = vcmp.eq.f32.partialorder %v574, inf
        %v915 = vsel %vm914, %v574, %v913
        %vm916 = vcmp.eq.f32.partialorder %v574, 0.0
        %v917 = vand.u32 %v574, 2147483648
        %v918 = vsel %vm916, %v917, %v915
        %v919 = vrsqrt.pop %v576
        %v920 = vmul.f32 %v919, %v576
        %v921 = vmul.f32 %v920, %v919
        %v922 = vmul.f32 0.5, %v921
        %v923 = vsub.f32 1.5, %v922
        %v924 = vmul.f32 %v919, %v923
        %v925 = vmul.f32 %v576, %v924
        %vm926 = vcmp.eq.f32.partialorder %v576, inf
        %v927 = vsel %vm926, %v576, %v925
        %vm928 = vcmp.eq.f32.partialorder %v576, 0.0
        %v929 = vand.u32 %v576, 2147483648
        %v930 = vsel %vm928, %v929, %v927
        %v931 = vrsqrt.pop %v578
        %v932 = vmul.f32 %v931, %v578
        %v933 = vmul.f32 %v932, %v931
        %v934 = vmul.f32 0.5, %v933
        %v935 = vsub.f32 1.5, %v934
        %v936 = vmul.f32 %v931, %v935
        %v937 = vmul.f32 %v578, %v936
        %vm938 = vcmp.eq.f32.partialorder %v578, inf
        %v939 = vsel %vm938, %v578, %v937
        %vm940 = vcmp.eq.f32.partialorder %v578, 0.0
        %v941 = vand.u32 %v578, 2147483648
        %v942 = vsel %vm940, %v941, %v939
        %v943 = vrsqrt.pop %v580
        %v944 = vmul.f32 %v943, %v580
        %v945 = vmul.f32 %v944, %v943
        %v946 = vmul.f32 0.5, %v945
        %v947 = vsub.f32 1.5, %v946
        %v948 = vmul.f32 %v943, %v947
        %v949 = vmul.f32 %v580, %v948
        %vm950 = vcmp.eq.f32.partialorder %v580, inf
        %v951 = vsel %vm950, %v580, %v949
        %vm952 = vcmp.eq.f32.partialorder %v580, 0.0
        %v953 = vand.u32 %v580, 2147483648
        %v954 = vsel %vm952, %v953, %v951
        %v955 = vrsqrt.pop %v582
        %v956 = vmul.f32 %v955, %v582
        %v957 = vmul.f32 %v956, %v955
        %v958 = vmul.f32 0.5, %v957
        %v959 = vsub.f32 1.5, %v958
        %v960 = vmul.f32 %v955, %v959
        %v961 = vmul.f32 %v582, %v960
        %vm962 = vcmp.eq.f32.partialorder %v582, inf
        %v963 = vsel %vm962, %v582, %v961
        %vm964 = vcmp.eq.f32.partialorder %v582, 0.0
        %v965 = vand.u32 %v582, 2147483648
        %v966 = vsel %vm964, %v965, %v963
        %v967 = vrsqrt.pop %v584
        %v968 = vmul.f32 %v967, %v584
        %v969 = vmul.f32 %v968, %v967
        %v970 = vmul.f32 0.5, %v969
        %v971 = vsub.f32 1.5, %v970
        %v972 = vmul.f32 %v967, %v971
        %v973 = vmul.f32 %v584, %v972
        %vm974 = vcmp.eq.f32.partialorder %v584, inf
        %v975 = vsel %vm974, %v584, %v973
        %vm976 = vcmp.eq.f32.partialorder %v584, 0.0
        %v977 = vand.u32 %v584, 2147483648
        %v978 = vsel %vm976, %v977, %v975
        %v979 = vrsqrt.pop %v586
        %v980 = vmul.f32 %v979, %v586
        %v981 = vmul.f32 %v980, %v979
        %v982 = vmul.f32 0.5, %v981
        %v983 = vsub.f32 1.5, %v982
        %v984 = vmul.f32 %v979, %v983
        %v985 = vmul.f32 %v586, %v984
        %vm986 = vcmp.eq.f32.partialorder %v586, inf
        %v987 = vsel %vm986, %v586, %v985
        %vm988 = vcmp.eq.f32.partialorder %v586, 0.0
        %v989 = vand.u32 %v586, 2147483648
        %v990 = vsel %vm988, %v989, %v987
        %v991 = vrsqrt.pop %v588
        %v992 = vmul.f32 %v991, %v588
        %v993 = vmul.f32 %v992, %v991
        %v994 = vmul.f32 0.5, %v993
        %v995 = vsub.f32 1.5, %v994
        %v996 = vmul.f32 %v991, %v995
        %v997 = vmul.f32 %v588, %v996
        %vm998 = vcmp.eq.f32.partialorder %v588, inf
        %v999 = vsel %vm998, %v588, %v997
        %vm1000 = vcmp.eq.f32.partialorder %v588, 0.0
        %v1001 = vand.u32 %v588, 2147483648
        %v1002 = vsel %vm1000, %v1001, %v999
        %v1003 = vrsqrt.pop %v590
        %v1004 = vmul.f32 %v1003, %v590
        %v1005 = vmul.f32 %v1004, %v1003
        %v1006 = vmul.f32 0.5, %v1005
        %v1007 = vsub.f32 1.5, %v1006
        %v1008 = vmul.f32 %v1003, %v1007
        %v1009 = vmul.f32 %v590, %v1008
        %vm1010 = vcmp.eq.f32.partialorder %v590, inf
        %v1011 = vsel %vm1010, %v590, %v1009
        %vm1012 = vcmp.eq.f32.partialorder %v590, 0.0
        %v1013 = vand.u32 %v590, 2147483648
        %v1014 = vsel %vm1012, %v1013, %v1011
        %v1015 = vrsqrt.pop %v592
        %v1016 = vmul.f32 %v1015, %v592
        %v1017 = vmul.f32 %v1016, %v1015
        %v1018 = vmul.f32 0.5, %v1017
        %v1019 = vsub.f32 1.5, %v1018
        %v1020 = vmul.f32 %v1015, %v1019
        %v1021 = vmul.f32 %v592, %v1020
        %vm1022 = vcmp.eq.f32.partialorder %v592, inf
        %v1023 = vsel %vm1022, %v592, %v1021
        %vm1024 = vcmp.eq.f32.partialorder %v592, 0.0
        %v1025 = vand.u32 %v592, 2147483648
        %v1026 = vsel %vm1024, %v1025, %v1023
        %v1027 = vrsqrt.pop %v594
        %v1028 = vmul.f32 %v1027, %v594
        %v1029 = vmul.f32 %v1028, %v1027
        %v1030 = vmul.f32 0.5, %v1029
        %v1031 = vsub.f32 1.5, %v1030
        %v1032 = vmul.f32 %v1027, %v1031
        %v1033 = vmul.f32 %v594, %v1032
        %vm1034 = vcmp.eq.f32.partialorder %v594, inf
        %v1035 = vsel %vm1034, %v594, %v1033
        %vm1036 = vcmp.eq.f32.partialorder %v594, 0.0
        %v1037 = vand.u32 %v594, 2147483648
        %v1038 = vsel %vm1036, %v1037, %v1035
        %v1039 = vrsqrt.pop %v596
        %v1040 = vmul.f32 %v1039, %v596
        %v1041 = vmul.f32 %v1040, %v1039
        %v1042 = vmul.f32 0.5, %v1041
        %v1043 = vsub.f32 1.5, %v1042
        %v1044 = vmul.f32 %v1039, %v1043
        %v1045 = vmul.f32 %v596, %v1044
        %vm1046 = vcmp.eq.f32.partialorder %v596, inf
        %v1047 = vsel %vm1046, %v596, %v1045
        %vm1048 = vcmp.eq.f32.partialorder %v596, 0.0
        %v1049 = vand.u32 %v596, 2147483648
        %v1050 = vsel %vm1048, %v1049, %v1047
        %v1051 = vrsqrt.pop %v598
        %v1052 = vmul.f32 %v1051, %v598
        %v1053 = vmul.f32 %v1052, %v1051
        %v1054 = vmul.f32 0.5, %v1053
        %v1055 = vsub.f32 1.5, %v1054
        %v1056 = vmul.f32 %v1051, %v1055
        %v1057 = vmul.f32 %v598, %v1056
        %vm1058 = vcmp.eq.f32.partialorder %v598, inf
        %v1059 = vsel %vm1058, %v598, %v1057
        %vm1060 = vcmp.eq.f32.partialorder %v598, 0.0
        %v1061 = vand.u32 %v598, 2147483648
        %v1062 = vsel %vm1060, %v1061, %v1059
        %v1063 = vadd.f32 %v882, 1e-06
        %v1064 = vadd.f32 %v894, 1e-06
        %v1065 = vadd.f32 %v906, 1e-06
        %v1066 = vadd.f32 %v918, 1e-06
        %v1067 = vadd.f32 %v930, 1e-06
        %v1068 = vadd.f32 %v942, 1e-06
        %v1069 = vadd.f32 %v954, 1e-06
        %v1070 = vadd.f32 %v966, 1e-06
        %v1071 = vadd.f32 %v978, 1e-06
        %v1072 = vadd.f32 %v990, 1e-06
        %v1073 = vadd.f32 %v1002, 1e-06
        %v1074 = vadd.f32 %v1014, 1e-06
        %v1075 = vadd.f32 %v1026, 1e-06
        %v1076 = vadd.f32 %v1038, 1e-06
        %v1077 = vadd.f32 %v1050, 1e-06
        %v1078 = vadd.f32 %v1062, 1e-06
        %v1079 = vrcp.pop %v1063
        %v1080 = vmul.f32 %v1063, %v1079
        %v1081 = vsub.f32 1.0, %v1080
        %v1082 = vmul.f32 %v1079, %v1081
        %v1083 = vadd.f32 %v1079, %v1082
        %vm1084 = vweird.f32 %v1063
        %vm1085 = vweird.f32 %v1079
        %vm1086 = vmor %vm1084, %vm1085
        %v1087 = vsel %vm1086, %v1079, %v1083
        %v1088 = vand.u32 2147483647, %v1063
        %vm1089 = vcmp.eq.f32.partialorder %v1088, 8.507059e+37
        %v1090 = vand.u32 %v1063, 2147483648
        %v1091 = vor.u32 1.1754944e-38, %v1090
        %v1092 = vsel %vm1089, %v1091, %v1087
        %v1093 = vrcp.pop %v1064
        %v1094 = vmul.f32 %v1064, %v1093
        %v1095 = vsub.f32 1.0, %v1094
        %v1096 = vmul.f32 %v1093, %v1095
        %v1097 = vadd.f32 %v1093, %v1096
        %vm1098 = vweird.f32 %v1064
        %vm1099 = vweird.f32 %v1093
        %vm1100 = vmor %vm1098, %vm1099
        %v1101 = vsel %vm1100, %v1093, %v1097
        %v1102 = vand.u32 2147483647, %v1064
        %vm1103 = vcmp.eq.f32.partialorder %v1102, 8.507059e+37
        %v1104 = vand.u32 %v1064, 2147483648
        %v1105 = vor.u32 1.1754944e-38, %v1104
        %v1106 = vsel %vm1103, %v1105, %v1101
        %v1107 = vrcp.pop %v1065
        %v1108 = vmul.f32 %v1065, %v1107
        %v1109 = vsub.f32 1.0, %v1108
        %v1110 = vmul.f32 %v1107, %v1109
        %v1111 = vadd.f32 %v1107, %v1110
        %vm1112 = vweird.f32 %v1065
        %vm1113 = vweird.f32 %v1107
        %vm1114 = vmor %vm1112, %vm1113
        %v1115 = vsel %vm1114, %v1107, %v1111
        %v1116 = vand.u32 2147483647, %v1065
        %vm1117 = vcmp.eq.f32.partialorder %v1116, 8.507059e+37
        %v1118 = vand.u32 %v1065, 2147483648
        %v1119 = vor.u32 1.1754944e-38, %v1118
        %v1120 = vsel %vm1117, %v1119, %v1115
        %v1121 = vrcp.pop %v1066
        %v1122 = vmul.f32 %v1066, %v1121
        %v1123 = vsub.f32 1.0, %v1122
        %v1124 = vmul.f32 %v1121, %v1123
        %v1125 = vadd.f32 %v1121, %v1124
        %vm1126 = vweird.f32 %v1066
        %vm1127 = vweird.f32 %v1121
        %vm1128 = vmor %vm1126, %vm1127
        %v1129 = vsel %vm1128, %v1121, %v1125
        %v1130 = vand.u32 2147483647, %v1066
        %vm1131 = vcmp.eq.f32.partialorder %v1130, 8.507059e+37
        %v1132 = vand.u32 %v1066, 2147483648
        %v1133 = vor.u32 1.1754944e-38, %v1132
        %v1134 = vsel %vm1131, %v1133, %v1129
        %v1135 = vrcp.pop %v1067
        %v1136 = vmul.f32 %v1067, %v1135
        %v1137 = vsub.f32 1.0, %v1136
        %v1138 = vmul.f32 %v1135, %v1137
        %v1139 = vadd.f32 %v1135, %v1138
        %vm1140 = vweird.f32 %v1067
        %vm1141 = vweird.f32 %v1135
        %vm1142 = vmor %vm1140, %vm1141
        %v1143 = vsel %vm1142, %v1135, %v1139
        %v1144 = vand.u32 2147483647, %v1067
        %vm1145 = vcmp.eq.f32.partialorder %v1144, 8.507059e+37
        %v1146 = vand.u32 %v1067, 2147483648
        %v1147 = vor.u32 1.1754944e-38, %v1146
        %v1148 = vsel %vm1145, %v1147, %v1143
        %v1149 = vrcp.pop %v1068
        %v1150 = vmul.f32 %v1068, %v1149
        %v1151 = vsub.f32 1.0, %v1150
        %v1152 = vmul.f32 %v1149, %v1151
        %v1153 = vadd.f32 %v1149, %v1152
        %vm1154 = vweird.f32 %v1068
        %vm1155 = vweird.f32 %v1149
        %vm1156 = vmor %vm1154, %vm1155
        %v1157 = vsel %vm1156, %v1149, %v1153
        %v1158 = vand.u32 2147483647, %v1068
        %vm1159 = vcmp.eq.f32.partialorder %v1158, 8.507059e+37
        %v1160 = vand.u32 %v1068, 2147483648
        %v1161 = vor.u32 1.1754944e-38, %v1160
        %v1162 = vsel %vm1159, %v1161, %v1157
        %v1163 = vrcp.pop %v1069
        %v1164 = vmul.f32 %v1069, %v1163
        %v1165 = vsub.f32 1.0, %v1164
        %v1166 = vmul.f32 %v1163, %v1165
        %v1167 = vadd.f32 %v1163, %v1166
        %vm1168 = vweird.f32 %v1069
        %vm1169 = vweird.f32 %v1163
        %vm1170 = vmor %vm1168, %vm1169
        %v1171 = vsel %vm1170, %v1163, %v1167
        %v1172 = vand.u32 2147483647, %v1069
        %vm1173 = vcmp.eq.f32.partialorder %v1172, 8.507059e+37
        %v1174 = vand.u32 %v1069, 2147483648
        %v1175 = vor.u32 1.1754944e-38, %v1174
        %v1176 = vsel %vm1173, %v1175, %v1171
        %v1177 = vrcp.pop %v1070
        %v1178 = vmul.f32 %v1070, %v1177
        %v1179 = vsub.f32 1.0, %v1178
        %v1180 = vmul.f32 %v1177, %v1179
        %v1181 = vadd.f32 %v1177, %v1180
        %vm1182 = vweird.f32 %v1070
        %vm1183 = vweird.f32 %v1177
        %vm1184 = vmor %vm1182, %vm1183
        %v1185 = vsel %vm1184, %v1177, %v1181
        %v1186 = vand.u32 2147483647, %v1070
        %vm1187 = vcmp.eq.f32.partialorder %v1186, 8.507059e+37
        %v1188 = vand.u32 %v1070, 2147483648
        %v1189 = vor.u32 1.1754944e-38, %v1188
        %v1190 = vsel %vm1187, %v1189, %v1185
        %v1191 = vrcp.pop %v1071
        %v1192 = vmul.f32 %v1071, %v1191
        %v1193 = vsub.f32 1.0, %v1192
        %v1194 = vmul.f32 %v1191, %v1193
        %v1195 = vadd.f32 %v1191, %v1194
        %vm1196 = vweird.f32 %v1071
        %vm1197 = vweird.f32 %v1191
        %vm1198 = vmor %vm1196, %vm1197
        %v1199 = vsel %vm1198, %v1191, %v1195
        %v1200 = vand.u32 2147483647, %v1071
        %vm1201 = vcmp.eq.f32.partialorder %v1200, 8.507059e+37
        %v1202 = vand.u32 %v1071, 2147483648
        %v1203 = vor.u32 1.1754944e-38, %v1202
        %v1204 = vsel %vm1201, %v1203, %v1199
        %v1205 = vrcp.pop %v1072
        %v1206 = vmul.f32 %v1072, %v1205
        %v1207 = vsub.f32 1.0, %v1206
        %v1208 = vmul.f32 %v1205, %v1207
        %v1209 = vadd.f32 %v1205, %v1208
        %vm1210 = vweird.f32 %v1072
        %vm1211 = vweird.f32 %v1205
        %vm1212 = vmor %vm1210, %vm1211
        %v1213 = vsel %vm1212, %v1205, %v1209
        %v1214 = vand.u32 2147483647, %v1072
        %vm1215 = vcmp.eq.f32.partialorder %v1214, 8.507059e+37
        %v1216 = vand.u32 %v1072, 2147483648
        %v1217 = vor.u32 1.1754944e-38, %v1216
        %v1218 = vsel %vm1215, %v1217, %v1213
        %v1219 = vrcp.pop %v1073
        %v1220 = vmul.f32 %v1073, %v1219
        %v1221 = vsub.f32 1.0, %v1220
        %v1222 = vmul.f32 %v1219, %v1221
        %v1223 = vadd.f32 %v1219, %v1222
        %vm1224 = vweird.f32 %v1073
        %vm1225 = vweird.f32 %v1219
        %vm1226 = vmor %vm1224, %vm1225
        %v1227 = vsel %vm1226, %v1219, %v1223
        %v1228 = vand.u32 2147483647, %v1073
        %vm1229 = vcmp.eq.f32.partialorder %v1228, 8.507059e+37
        %v1230 = vand.u32 %v1073, 2147483648
        %v1231 = vor.u32 1.1754944e-38, %v1230
        %v1232 = vsel %vm1229, %v1231, %v1227
        %v1233 = vrcp.pop %v1074
        %v1234 = vmul.f32 %v1074, %v1233
        %v1235 = vsub.f32 1.0, %v1234
        %v1236 = vmul.f32 %v1233, %v1235
        %v1237 = vadd.f32 %v1233, %v1236
        %vm1238 = vweird.f32 %v1074
        %vm1239 = vweird.f32 %v1233
        %vm1240 = vmor %vm1238, %vm1239
        %v1241 = vsel %vm1240, %v1233, %v1237
        %v1242 = vand.u32 2147483647, %v1074
        %vm1243 = vcmp.eq.f32.partialorder %v1242, 8.507059e+37
        %v1244 = vand.u32 %v1074, 2147483648
        %v1245 = vor.u32 1.1754944e-38, %v1244
        %v1246 = vsel %vm1243, %v1245, %v1241
        %v1247 = vrcp.pop %v1075
        %v1248 = vmul.f32 %v1075, %v1247
        %v1249 = vsub.f32 1.0, %v1248
        %v1250 = vmul.f32 %v1247, %v1249
        %v1251 = vadd.f32 %v1247, %v1250
        %vm1252 = vweird.f32 %v1075
        %vm1253 = vweird.f32 %v1247
        %vm1254 = vmor %vm1252, %vm1253
        %v1255 = vsel %vm1254, %v1247, %v1251
        %v1256 = vand.u32 2147483647, %v1075
        %vm1257 = vcmp.eq.f32.partialorder %v1256, 8.507059e+37
        %v1258 = vand.u32 %v1075, 2147483648
        %v1259 = vor.u32 1.1754944e-38, %v1258
        %v1260 = vsel %vm1257, %v1259, %v1255
        %v1261 = vrcp.pop %v1076
        %v1262 = vmul.f32 %v1076, %v1261
        %v1263 = vsub.f32 1.0, %v1262
        %v1264 = vmul.f32 %v1261, %v1263
        %v1265 = vadd.f32 %v1261, %v1264
        %vm1266 = vweird.f32 %v1076
        %vm1267 = vweird.f32 %v1261
        %vm1268 = vmor %vm1266, %vm1267
        %v1269 = vsel %vm1268, %v1261, %v1265
        %v1270 = vand.u32 2147483647, %v1076
        %vm1271 = vcmp.eq.f32.partialorder %v1270, 8.507059e+37
        %v1272 = vand.u32 %v1076, 2147483648
        %v1273 = vor.u32 1.1754944e-38, %v1272
        %v1274 = vsel %vm1271, %v1273, %v1269
        %v1275 = vrcp.pop %v1077
        %v1276 = vmul.f32 %v1077, %v1275
        %v1277 = vsub.f32 1.0, %v1276
        %v1278 = vmul.f32 %v1275, %v1277
        %v1279 = vadd.f32 %v1275, %v1278
        %vm1280 = vweird.f32 %v1077
        %vm1281 = vweird.f32 %v1275
        %vm1282 = vmor %vm1280, %vm1281
        %v1283 = vsel %vm1282, %v1275, %v1279
        %v1284 = vand.u32 2147483647, %v1077
        %vm1285 = vcmp.eq.f32.partialorder %v1284, 8.507059e+37
        %v1286 = vand.u32 %v1077, 2147483648
        %v1287 = vor.u32 1.1754944e-38, %v1286
        %v1288 = vsel %vm1285, %v1287, %v1283
        %v1289 = vrcp.pop %v1078
        %v1290 = vmul.f32 %v1078, %v1289
        %v1291 = vsub.f32 1.0, %v1290
        %v1292 = vmul.f32 %v1289, %v1291
        %v1293 = vadd.f32 %v1289, %v1292
        %vm1294 = vweird.f32 %v1078
        %vm1295 = vweird.f32 %v1289
        %vm1296 = vmor %vm1294, %vm1295
        %v1297 = vsel %vm1296, %v1289, %v1293
        %v1298 = vand.u32 2147483647, %v1078
        %vm1299 = vcmp.eq.f32.partialorder %v1298, 8.507059e+37
        %v1300 = vand.u32 %v1078, 2147483648
        %v1301 = vor.u32 1.1754944e-38, %v1300
        %v1302 = vsel %vm1299, %v1301, %v1297
        %v1303 = vsel %vm855, %v1092, 0.0
        %v1304 = vsel %vm856, %v1106, 0.0
        %v1305 = vsel %vm857, %v1120, 0.0
        %v1306 = vsel %vm858, %v1134, 0.0
        %v1307 = vsel %vm859, %v1148, 0.0
        %v1308 = vsel %vm860, %v1162, 0.0
        %v1309 = vsel %vm861, %v1176, 0.0
        %v1310 = vsel %vm862, %v1190, 0.0
        %v1311 = vsel %vm863, %v1204, 0.0
        %v1312 = vsel %vm864, %v1218, 0.0
        %v1313 = vsel %vm865, %v1232, 0.0
        %v1314 = vsel %vm866, %v1246, 0.0
        %v1315 = vsel %vm867, %v1260, 0.0
        %v1316 = vsel %vm868, %v1274, 0.0
        %v1317 = vsel %vm869, %v1288, 0.0
        %v1318 = vsel %vm870, %v1302, 0.0
        %v1319 = vadd.f32 %v1303, 0.0
        %v1320 = vadd.f32 %v1304, 0.0
        %v1321 = vadd.f32 %v1305, 0.0
        %v1322 = vadd.f32 %v1306, 0.0
        %v1323 = vadd.f32 %v1307, 0.0
        %v1324 = vadd.f32 %v1308, 0.0
        %v1325 = vadd.f32 %v1309, 0.0
        %v1326 = vadd.f32 %v1310, 0.0
        %v1327 = vadd.f32 %v1311, 0.0
        %v1328 = vadd.f32 %v1312, 0.0
        %v1329 = vadd.f32 %v1313, 0.0
        %v1330 = vadd.f32 %v1314, 0.0
        %v1331 = vadd.f32 %v1315, 0.0
        %v1332 = vadd.f32 %v1316, 0.0
        %v1333 = vadd.f32 %v1317, 0.0
        %v1334 = vadd.f32 %v1318, 0.0
        %v1335 = vsel %vm855, inf, %v549
        %v1336 = vsel %vm856, inf, %v550
        %v1337 = vsel %vm857, inf, %v551
        %v1338 = vsel %vm858, inf, %v552
        %v1339 = vsel %vm859, inf, %v553
        %v1340 = vsel %vm860, inf, %v554
        %v1341 = vsel %vm861, inf, %v555
        %v1342 = vsel %vm862, inf, %v556
        %v1343 = vsel %vm863, inf, %v557
        %v1344 = vsel %vm864, inf, %v558
        %v1345 = vsel %vm865, inf, %v559
        %v1346 = vsel %vm866, inf, %v560
        %v1347 = vsel %vm867, inf, %v561
        %v1348 = vsel %vm868, inf, %v562
        %v1349 = vsel %vm869, inf, %v563
        %v1350 = vsel %vm870, inf, %v564
        %1351 = vmin.xlane.f32.xlu0 %v1335
        %v1352 = vpop.xlane.xlu0 %1351
        %1353 = vmin.xlane.f32.xlu0 %v1336
        %v1354 = vpop.xlane.xlu0 %1353
        %1355 = vmin.xlane.f32.xlu0 %v1337
        %v1356 = vpop.xlane.xlu0 %1355
        %1357 = vmin.xlane.f32.xlu0 %v1338
        %v1358 = vpop.xlane.xlu0 %1357
        %1359 = vmin.xlane.f32.xlu0 %v1339
        %v1360 = vpop.xlane.xlu0 %1359
        %1361 = vmin.xlane.f32.xlu0 %v1340
        %v1362 = vpop.xlane.xlu0 %1361
        %1363 = vmin.xlane.f32.xlu0 %v1341
        %v1364 = vpop.xlane.xlu0 %1363
        %1365 = vmin.xlane.f32.xlu0 %v1342
        %v1366 = vpop.xlane.xlu0 %1365
        %1367 = vmin.xlane.f32.xlu0 %v1343
        %v1368 = vpop.xlane.xlu0 %1367
        %1369 = vmin.xlane.f32.xlu0 %v1344
        %v1370 = vpop.xlane.xlu0 %1369
        %1371 = vmin.xlane.f32.xlu0 %v1345
        %v1372 = vpop.xlane.xlu0 %1371
        %1373 = vmin.xlane.f32.xlu0 %v1346
        %v1374 = vpop.xlane.xlu0 %1373
        %1375 = vmin.xlane.f32.xlu0 %v1347
        %v1376 = vpop.xlane.xlu0 %1375
        %1377 = vmin.xlane.f32.xlu0 %v1348
        %v1378 = vpop.xlane.xlu0 %1377
        %1379 = vmin.xlane.f32.xlu0 %v1349
        %v1380 = vpop.xlane.xlu0 %1379
        %1381 = vmin.xlane.f32.xlu0 %v1350
        %v1382 = vpop.xlane.xlu0 %1381
        %vm1383 = vcmp.eq.f32.partialorder %v1335, %v1352
        %vm1384 = vcmp.eq.f32.partialorder %v1336, %v1354
        %vm1385 = vcmp.eq.f32.partialorder %v1337, %v1356
        %vm1386 = vcmp.eq.f32.partialorder %v1338, %v1358
        %vm1387 = vcmp.eq.f32.partialorder %v1339, %v1360
        %vm1388 = vcmp.eq.f32.partialorder %v1340, %v1362
        %vm1389 = vcmp.eq.f32.partialorder %v1341, %v1364
        %vm1390 = vcmp.eq.f32.partialorder %v1342, %v1366
        %vm1391 = vcmp.eq.f32.partialorder %v1343, %v1368
        %vm1392 = vcmp.eq.f32.partialorder %v1344, %v1370
        %vm1393 = vcmp.eq.f32.partialorder %v1345, %v1372
        %vm1394 = vcmp.eq.f32.partialorder %v1346, %v1374
        %vm1395 = vcmp.eq.f32.partialorder %v1347, %v1376
        %vm1396 = vcmp.eq.f32.partialorder %v1348, %v1378
        %vm1397 = vcmp.eq.f32.partialorder %v1349, %v1380
        %vm1398 = vcmp.eq.f32.partialorder %v1350, %v1382
        %v1399 = vsel %vm1383, %v566, 128
        %v1400 = vsel %vm1384, %v566, 128
        %v1401 = vsel %vm1385, %v566, 128
        %v1402 = vsel %vm1386, %v566, 128
        %v1403 = vsel %vm1387, %v566, 128
        %v1404 = vsel %vm1388, %v566, 128
        %v1405 = vsel %vm1389, %v566, 128
        %v1406 = vsel %vm1390, %v566, 128
        %v1407 = vsel %vm1391, %v566, 128
        %v1408 = vsel %vm1392, %v566, 128
        %v1409 = vsel %vm1393, %v566, 128
        %v1410 = vsel %vm1394, %v566, 128
        %v1411 = vsel %vm1395, %v566, 128
        %v1412 = vsel %vm1396, %v566, 128
        %v1413 = vsel %vm1397, %v566, 128
        %v1414 = vsel %vm1398, %v566, 128
        %v1415 = vand.u32 %v1399, 65535
        %v1416 = vshra.s32 %v1399, 16
        %v1417 = vcvt.s32.f32 %v1415
        %v1418 = vcvt.s32.f32 %v1416
        %1419 = vmin.xlane.f32.xlu0 %v1418
        %v1420 = vpop.xlane.xlu0 %1419
        %vm1421 = vcmp.eq.f32.partialorder %v1418, %v1420
        %v1422 = vsel %vm1421, %v1417, inf
        %1423 = vmin.xlane.f32.xlu0 %v1422
        %v1424 = vpop.xlane.xlu0 %1423
        %v1425 = vcvt.f32.s32 %v1424
        %v1426 = vcvt.f32.s32 %v1420
        %v1427 = vshll.u32 %v1426, 16
        %v1428 = vadd.s32 %v1427, %v1425
        %v1429 = vand.u32 %v1400, 65535
        %v1430 = vshra.s32 %v1400, 16
        %v1431 = vcvt.s32.f32 %v1429
        %v1432 = vcvt.s32.f32 %v1430
        %1433 = vmin.xlane.f32.xlu0 %v1432
        %v1434 = vpop.xlane.xlu0 %1433
        %vm1435 = vcmp.eq.f32.partialorder %v1432, %v1434
        %v1436 = vsel %vm1435, %v1431, inf
        %1437 = vmin.xlane.f32.xlu0 %v1436
        %v1438 = vpop.xlane.xlu0 %1437
        %v1439 = vcvt.f32.s32 %v1438
        %v1440 = vcvt.f32.s32 %v1434
        %v1441 = vshll.u32 %v1440, 16
        %v1442 = vadd.s32 %v1441, %v1439
        %v1443 = vand.u32 %v1401, 65535
        %v1444 = vshra.s32 %v1401, 16
        %v1445 = vcvt.s32.f32 %v1443
        %v1446 = vcvt.s32.f32 %v1444
        %1447 = vmin.xlane.f32.xlu0 %v1446
        %v1448 = vpop.xlane.xlu0 %1447
        %vm1449 = vcmp.eq.f32.partialorder %v1446, %v1448
        %v1450 = vsel %vm1449, %v1445, inf
        %1451 = vmin.xlane.f32.xlu0 %v1450
        %v1452 = vpop.xlane.xlu0 %1451
        %v1453 = vcvt.f32.s32 %v1452
        %v1454 = vcvt.f32.s32 %v1448
        %v1455 = vshll.u32 %v1454, 16
        %v1456 = vadd.s32 %v1455, %v1453
        %v1457 = vand.u32 %v1402, 65535
        %v1458 = vshra.s32 %v1402, 16
        %v1459 = vcvt.s32.f32 %v1457
        %v1460 = vcvt.s32.f32 %v1458
        %1461 = vmin.xlane.f32.xlu0 %v1460
        %v1462 = vpop.xlane.xlu0 %1461
        %vm1463 = vcmp.eq.f32.partialorder %v1460, %v1462
        %v1464 = vsel %vm1463, %v1459, inf
        %1465 = vmin.xlane.f32.xlu0 %v1464
        %v1466 = vpop.xlane.xlu0 %1465
        %v1467 = vcvt.f32.s32 %v1466
        %v1468 = vcvt.f32.s32 %v1462
        %v1469 = vshll.u32 %v1468, 16
        %v1470 = vadd.s32 %v1469, %v1467
        %v1471 = vand.u32 %v1403, 65535
        %v1472 = vshra.s32 %v1403, 16
        %v1473 = vcvt.s32.f32 %v1471
        %v1474 = vcvt.s32.f32 %v1472
        %1475 = vmin.xlane.f32.xlu0 %v1474
        %v1476 = vpop.xlane.xlu0 %1475
        %vm1477 = vcmp.eq.f32.partialorder %v1474, %v1476
        %v1478 = vsel %vm1477, %v1473, inf
        %1479 = vmin.xlane.f32.xlu0 %v1478
        %v1480 = vpop.xlane.xlu0 %1479
        %v1481 = vcvt.f32.s32 %v1480
        %v1482 = vcvt.f32.s32 %v1476
        %v1483 = vshll.u32 %v1482, 16
        %v1484 = vadd.s32 %v1483, %v1481
        %v1485 = vand.u32 %v1404, 65535
        %v1486 = vshra.s32 %v1404, 16
        %v1487 = vcvt.s32.f32 %v1485
        %v1488 = vcvt.s32.f32 %v1486
        %1489 = vmin.xlane.f32.xlu0 %v1488
        %v1490 = vpop.xlane.xlu0 %1489
        %vm1491 = vcmp.eq.f32.partialorder %v1488, %v1490
        %v1492 = vsel %vm1491, %v1487, inf
        %1493 = vmin.xlane.f32.xlu0 %v1492
        %v1494 = vpop.xlane.xlu0 %1493
        %v1495 = vcvt.f32.s32 %v1494
        %v1496 = vcvt.f32.s32 %v1490
        %v1497 = vshll.u32 %v1496, 16
        %v1498 = vadd.s32 %v1497, %v1495
        %v1499 = vand.u32 %v1405, 65535
        %v1500 = vshra.s32 %v1405, 16
        %v1501 = vcvt.s32.f32 %v1499
        %v1502 = vcvt.s32.f32 %v1500
        %1503 = vmin.xlane.f32.xlu0 %v1502
        %v1504 = vpop.xlane.xlu0 %1503
        %vm1505 = vcmp.eq.f32.partialorder %v1502, %v1504
        %v1506 = vsel %vm1505, %v1501, inf
        %1507 = vmin.xlane.f32.xlu0 %v1506
        %v1508 = vpop.xlane.xlu0 %1507
        %v1509 = vcvt.f32.s32 %v1508
        %v1510 = vcvt.f32.s32 %v1504
        %v1511 = vshll.u32 %v1510, 16
        %v1512 = vadd.s32 %v1511, %v1509
        %v1513 = vand.u32 %v1406, 65535
        %v1514 = vshra.s32 %v1406, 16
        %v1515 = vcvt.s32.f32 %v1513
        %v1516 = vcvt.s32.f32 %v1514
        %1517 = vmin.xlane.f32.xlu0 %v1516
        %v1518 = vpop.xlane.xlu0 %1517
        %vm1519 = vcmp.eq.f32.partialorder %v1516, %v1518
        %v1520 = vsel %vm1519, %v1515, inf
        %1521 = vmin.xlane.f32.xlu0 %v1520
        %v1522 = vpop.xlane.xlu0 %1521
        %v1523 = vcvt.f32.s32 %v1522
        %v1524 = vcvt.f32.s32 %v1518
        %v1525 = vshll.u32 %v1524, 16
        %v1526 = vadd.s32 %v1525, %v1523
        %v1527 = vand.u32 %v1407, 65535
        %v1528 = vshra.s32 %v1407, 16
        %v1529 = vcvt.s32.f32 %v1527
        %v1530 = vcvt.s32.f32 %v1528
        %1531 = vmin.xlane.f32.xlu0 %v1530
        %v1532 = vpop.xlane.xlu0 %1531
        %vm1533 = vcmp.eq.f32.partialorder %v1530, %v1532
        %v1534 = vsel %vm1533, %v1529, inf
        %1535 = vmin.xlane.f32.xlu0 %v1534
        %v1536 = vpop.xlane.xlu0 %1535
        %v1537 = vcvt.f32.s32 %v1536
        %v1538 = vcvt.f32.s32 %v1532
        %v1539 = vshll.u32 %v1538, 16
        %v1540 = vadd.s32 %v1539, %v1537
        %v1541 = vand.u32 %v1408, 65535
        %v1542 = vshra.s32 %v1408, 16
        %v1543 = vcvt.s32.f32 %v1541
        %v1544 = vcvt.s32.f32 %v1542
        %1545 = vmin.xlane.f32.xlu0 %v1544
        %v1546 = vpop.xlane.xlu0 %1545
        %vm1547 = vcmp.eq.f32.partialorder %v1544, %v1546
        %v1548 = vsel %vm1547, %v1543, inf
        %1549 = vmin.xlane.f32.xlu0 %v1548
        %v1550 = vpop.xlane.xlu0 %1549
        %v1551 = vcvt.f32.s32 %v1550
        %v1552 = vcvt.f32.s32 %v1546
        %v1553 = vshll.u32 %v1552, 16
        %v1554 = vadd.s32 %v1553, %v1551
        %v1555 = vand.u32 %v1409, 65535
        %v1556 = vshra.s32 %v1409, 16
        %v1557 = vcvt.s32.f32 %v1555
        %v1558 = vcvt.s32.f32 %v1556
        %1559 = vmin.xlane.f32.xlu0 %v1558
        %v1560 = vpop.xlane.xlu0 %1559
        %vm1561 = vcmp.eq.f32.partialorder %v1558, %v1560
        %v1562 = vsel %vm1561, %v1557, inf
        %1563 = vmin.xlane.f32.xlu0 %v1562
        %v1564 = vpop.xlane.xlu0 %1563
        %v1565 = vcvt.f32.s32 %v1564
        %v1566 = vcvt.f32.s32 %v1560
        %v1567 = vshll.u32 %v1566, 16
        %v1568 = vadd.s32 %v1567, %v1565
        %v1569 = vand.u32 %v1410, 65535
        %v1570 = vshra.s32 %v1410, 16
        %v1571 = vcvt.s32.f32 %v1569
        %v1572 = vcvt.s32.f32 %v1570
        %1573 = vmin.xlane.f32.xlu0 %v1572
        %v1574 = vpop.xlane.xlu0 %1573
        %vm1575 = vcmp.eq.f32.partialorder %v1572, %v1574
        %v1576 = vsel %vm1575, %v1571, inf
        %1577 = vmin.xlane.f32.xlu0 %v1576
        %v1578 = vpop.xlane.xlu0 %1577
        %v1579 = vcvt.f32.s32 %v1578
        %v1580 = vcvt.f32.s32 %v1574
        %v1581 = vshll.u32 %v1580, 16
        %v1582 = vadd.s32 %v1581, %v1579
        %v1583 = vand.u32 %v1411, 65535
        %v1584 = vshra.s32 %v1411, 16
        %v1585 = vcvt.s32.f32 %v1583
        %v1586 = vcvt.s32.f32 %v1584
        %1587 = vmin.xlane.f32.xlu0 %v1586
        %v1588 = vpop.xlane.xlu0 %1587
        %vm1589 = vcmp.eq.f32.partialorder %v1586, %v1588
        %v1590 = vsel %vm1589, %v1585, inf
        %1591 = vmin.xlane.f32.xlu0 %v1590
        %v1592 = vpop.xlane.xlu0 %1591
        %v1593 = vcvt.f32.s32 %v1592
        %v1594 = vcvt.f32.s32 %v1588
        %v1595 = vshll.u32 %v1594, 16
        %v1596 = vadd.s32 %v1595, %v1593
        %v1597 = vand.u32 %v1412, 65535
        %v1598 = vshra.s32 %v1412, 16
        %v1599 = vcvt.s32.f32 %v1597
        %v1600 = vcvt.s32.f32 %v1598
        %1601 = vmin.xlane.f32.xlu0 %v1600
        %v1602 = vpop.xlane.xlu0 %1601
        %vm1603 = vcmp.eq.f32.partialorder %v1600, %v1602
        %v1604 = vsel %vm1603, %v1599, inf
        %1605 = vmin.xlane.f32.xlu0 %v1604
        %v1606 = vpop.xlane.xlu0 %1605
        %v1607 = vcvt.f32.s32 %v1606
        %v1608 = vcvt.f32.s32 %v1602
        %v1609 = vshll.u32 %v1608, 16
        %v1610 = vadd.s32 %v1609, %v1607
        %v1611 = vand.u32 %v1413, 65535
        %v1612 = vshra.s32 %v1413, 16
        %v1613 = vcvt.s32.f32 %v1611
        %v1614 = vcvt.s32.f32 %v1612
        %1615 = vmin.xlane.f32.xlu0 %v1614
        %v1616 = vpop.xlane.xlu0 %1615
        %vm1617 = vcmp.eq.f32.partialorder %v1614, %v1616
        %v1618 = vsel %vm1617, %v1613, inf
        %1619 = vmin.xlane.f32.xlu0 %v1618
        %v1620 = vpop.xlane.xlu0 %1619
        %v1621 = vcvt.f32.s32 %v1620
        %v1622 = vcvt.f32.s32 %v1616
        %v1623 = vshll.u32 %v1622, 16
        %v1624 = vadd.s32 %v1623, %v1621
        %v1625 = vand.u32 %v1414, 65535
        %v1626 = vshra.s32 %v1414, 16
        %v1627 = vcvt.s32.f32 %v1625
        %v1628 = vcvt.s32.f32 %v1626
        %1629 = vmin.xlane.f32.xlu0 %v1628
        %v1630 = vpop.xlane.xlu0 %1629
        %vm1631 = vcmp.eq.f32.partialorder %v1628, %v1630
        %v1632 = vsel %vm1631, %v1627, inf
        %1633 = vmin.xlane.f32.xlu0 %v1632
        %v1634 = vpop.xlane.xlu0 %1633
        %v1635 = vcvt.f32.s32 %v1634
        %v1636 = vcvt.f32.s32 %v1630
        %v1637 = vshll.u32 %v1636, 16
        %v1638 = vadd.s32 %v1637, %v1635
        %vm1639 = vcmp.eq.s32.totalorder %v566, %v1428
        %vm1640 = vcmp.eq.s32.totalorder %v566, %v1442
        %vm1641 = vcmp.eq.s32.totalorder %v566, %v1456
        %vm1642 = vcmp.eq.s32.totalorder %v566, %v1470
        %vm1643 = vcmp.eq.s32.totalorder %v566, %v1484
        %vm1644 = vcmp.eq.s32.totalorder %v566, %v1498
        %vm1645 = vcmp.eq.s32.totalorder %v566, %v1512
        %vm1646 = vcmp.eq.s32.totalorder %v566, %v1526
        %vm1647 = vcmp.eq.s32.totalorder %v566, %v1540
        %vm1648 = vcmp.eq.s32.totalorder %v566, %v1554
        %vm1649 = vcmp.eq.s32.totalorder %v566, %v1568
        %vm1650 = vcmp.eq.s32.totalorder %v566, %v1582
        %vm1651 = vcmp.eq.s32.totalorder %v566, %v1596
        %vm1652 = vcmp.eq.s32.totalorder %v566, %v1610
        %vm1653 = vcmp.eq.s32.totalorder %v566, %v1624
        %vm1654 = vcmp.eq.s32.totalorder %v566, %v1638
        %v1655 = vrsqrt.pop %v1352
        %v1656 = vmul.f32 %v1655, %v1352
        %v1657 = vmul.f32 %v1656, %v1655
        %v1658 = vmul.f32 0.5, %v1657
        %v1659 = vsub.f32 1.5, %v1658
        %v1660 = vmul.f32 %v1655, %v1659
        %v1661 = vmul.f32 %v1352, %v1660
        %vm1662 = vcmp.eq.f32.partialorder %v1352, inf
        %v1663 = vsel %vm1662, %v1352, %v1661
        %vm1664 = vcmp.eq.f32.partialorder %v1352, 0.0
        %v1665 = vand.u32 %v1352, 2147483648
        %v1666 = vsel %vm1664, %v1665, %v1663
        %v1667 = vrsqrt.pop %v1354
        %v1668 = vmul.f32 %v1667, %v1354
        %v1669 = vmul.f32 %v1668, %v1667
        %v1670 = vmul.f32 0.5, %v1669
        %v1671 = vsub.f32 1.5, %v1670
        %v1672 = vmul.f32 %v1667, %v1671
        %v1673 = vmul.f32 %v1354, %v1672
        %vm1674 = vcmp.eq.f32.partialorder %v1354, inf
        %v1675 = vsel %vm1674, %v1354, %v1673
        %vm1676 = vcmp.eq.f32.partialorder %v1354, 0.0
        %v1677 = vand.u32 %v1354, 2147483648
        %v1678 = vsel %vm1676, %v1677, %v1675
        %v1679 = vrsqrt.pop %v1356
        %v1680 = vmul.f32 %v1679, %v1356
        %v1681 = vmul.f32 %v1680, %v1679
        %v1682 = vmul.f32 0.5, %v1681
        %v1683 = vsub.f32 1.5, %v1682
        %v1684 = vmul.f32 %v1679, %v1683
        %v1685 = vmul.f32 %v1356, %v1684
        %vm1686 = vcmp.eq.f32.partialorder %v1356, inf
        %v1687 = vsel %vm1686, %v1356, %v1685
        %vm1688 = vcmp.eq.f32.partialorder %v1356, 0.0
        %v1689 = vand.u32 %v1356, 2147483648
        %v1690 = vsel %vm1688, %v1689, %v1687
        %v1691 = vrsqrt.pop %v1358
        %v1692 = vmul.f32 %v1691, %v1358
        %v1693 = vmul.f32 %v1692, %v1691
        %v1694 = vmul.f32 0.5, %v1693
        %v1695 = vsub.f32 1.5, %v1694
        %v1696 = vmul.f32 %v1691, %v1695
        %v1697 = vmul.f32 %v1358, %v1696
        %vm1698 = vcmp.eq.f32.partialorder %v1358, inf
        %v1699 = vsel %vm1698, %v1358, %v1697
        %vm1700 = vcmp.eq.f32.partialorder %v1358, 0.0
        %v1701 = vand.u32 %v1358, 2147483648
        %v1702 = vsel %vm1700, %v1701, %v1699
        %v1703 = vrsqrt.pop %v1360
        %v1704 = vmul.f32 %v1703, %v1360
        %v1705 = vmul.f32 %v1704, %v1703
        %v1706 = vmul.f32 0.5, %v1705
        %v1707 = vsub.f32 1.5, %v1706
        %v1708 = vmul.f32 %v1703, %v1707
        %v1709 = vmul.f32 %v1360, %v1708
        %vm1710 = vcmp.eq.f32.partialorder %v1360, inf
        %v1711 = vsel %vm1710, %v1360, %v1709
        %vm1712 = vcmp.eq.f32.partialorder %v1360, 0.0
        %v1713 = vand.u32 %v1360, 2147483648
        %v1714 = vsel %vm1712, %v1713, %v1711
        %v1715 = vrsqrt.pop %v1362
        %v1716 = vmul.f32 %v1715, %v1362
        %v1717 = vmul.f32 %v1716, %v1715
        %v1718 = vmul.f32 0.5, %v1717
        %v1719 = vsub.f32 1.5, %v1718
        %v1720 = vmul.f32 %v1715, %v1719
        %v1721 = vmul.f32 %v1362, %v1720
        %vm1722 = vcmp.eq.f32.partialorder %v1362, inf
        %v1723 = vsel %vm1722, %v1362, %v1721
        %vm1724 = vcmp.eq.f32.partialorder %v1362, 0.0
        %v1725 = vand.u32 %v1362, 2147483648
        %v1726 = vsel %vm1724, %v1725, %v1723
        %v1727 = vrsqrt.pop %v1364
        %v1728 = vmul.f32 %v1727, %v1364
        %v1729 = vmul.f32 %v1728, %v1727
        %v1730 = vmul.f32 0.5, %v1729
        %v1731 = vsub.f32 1.5, %v1730
        %v1732 = vmul.f32 %v1727, %v1731
        %v1733 = vmul.f32 %v1364, %v1732
        %vm1734 = vcmp.eq.f32.partialorder %v1364, inf
        %v1735 = vsel %vm1734, %v1364, %v1733
        %vm1736 = vcmp.eq.f32.partialorder %v1364, 0.0
        %v1737 = vand.u32 %v1364, 2147483648
        %v1738 = vsel %vm1736, %v1737, %v1735
        %v1739 = vrsqrt.pop %v1366
        %v1740 = vmul.f32 %v1739, %v1366
        %v1741 = vmul.f32 %v1740, %v1739
        %v1742 = vmul.f32 0.5, %v1741
        %v1743 = vsub.f32 1.5, %v1742
        %v1744 = vmul.f32 %v1739, %v1743
        %v1745 = vmul.f32 %v1366, %v1744
        %vm1746 = vcmp.eq.f32.partialorder %v1366, inf
        %v1747 = vsel %vm1746, %v1366, %v1745
        %vm1748 = vcmp.eq.f32.partialorder %v1366, 0.0
        %v1749 = vand.u32 %v1366, 2147483648
        %v1750 = vsel %vm1748, %v1749, %v1747
        %v1751 = vrsqrt.pop %v1368
        %v1752 = vmul.f32 %v1751, %v1368
        %v1753 = vmul.f32 %v1752, %v1751
        %v1754 = vmul.f32 0.5, %v1753
        %v1755 = vsub.f32 1.5, %v1754
        %v1756 = vmul.f32 %v1751, %v1755
        %v1757 = vmul.f32 %v1368, %v1756
        %vm1758 = vcmp.eq.f32.partialorder %v1368, inf
        %v1759 = vsel %vm1758, %v1368, %v1757
        %vm1760 = vcmp.eq.f32.partialorder %v1368, 0.0
        %v1761 = vand.u32 %v1368, 2147483648
        %v1762 = vsel %vm1760, %v1761, %v1759
        %v1763 = vrsqrt.pop %v1370
        %v1764 = vmul.f32 %v1763, %v1370
        %v1765 = vmul.f32 %v1764, %v1763
        %v1766 = vmul.f32 0.5, %v1765
        %v1767 = vsub.f32 1.5, %v1766
        %v1768 = vmul.f32 %v1763, %v1767
        %v1769 = vmul.f32 %v1370, %v1768
        %vm1770 = vcmp.eq.f32.partialorder %v1370, inf
        %v1771 = vsel %vm1770, %v1370, %v1769
        %vm1772 = vcmp.eq.f32.partialorder %v1370, 0.0
        %v1773 = vand.u32 %v1370, 2147483648
        %v1774 = vsel %vm1772, %v1773, %v1771
        %v1775 = vrsqrt.pop %v1372
        %v1776 = vmul.f32 %v1775, %v1372
        %v1777 = vmul.f32 %v1776, %v1775
        %v1778 = vmul.f32 0.5, %v1777
        %v1779 = vsub.f32 1.5, %v1778
        %v1780 = vmul.f32 %v1775, %v1779
        %v1781 = vmul.f32 %v1372, %v1780
        %vm1782 = vcmp.eq.f32.partialorder %v1372, inf
        %v1783 = vsel %vm1782, %v1372, %v1781
        %vm1784 = vcmp.eq.f32.partialorder %v1372, 0.0
        %v1785 = vand.u32 %v1372, 2147483648
        %v1786 = vsel %vm1784, %v1785, %v1783
        %v1787 = vrsqrt.pop %v1374
        %v1788 = vmul.f32 %v1787, %v1374
        %v1789 = vmul.f32 %v1788, %v1787
        %v1790 = vmul.f32 0.5, %v1789
        %v1791 = vsub.f32 1.5, %v1790
        %v1792 = vmul.f32 %v1787, %v1791
        %v1793 = vmul.f32 %v1374, %v1792
        %vm1794 = vcmp.eq.f32.partialorder %v1374, inf
        %v1795 = vsel %vm1794, %v1374, %v1793
        %vm1796 = vcmp.eq.f32.partialorder %v1374, 0.0
        %v1797 = vand.u32 %v1374, 2147483648
        %v1798 = vsel %vm1796, %v1797, %v1795
        %v1799 = vrsqrt.pop %v1376
        %v1800 = vmul.f32 %v1799, %v1376
        %v1801 = vmul.f32 %v1800, %v1799
        %v1802 = vmul.f32 0.5, %v1801
        %v1803 = vsub.f32 1.5, %v1802
        %v1804 = vmul.f32 %v1799, %v1803
        %v1805 = vmul.f32 %v1376, %v1804
        %vm1806 = vcmp.eq.f32.partialorder %v1376, inf
        %v1807 = vsel %vm1806, %v1376, %v1805
        %vm1808 = vcmp.eq.f32.partialorder %v1376, 0.0
        %v1809 = vand.u32 %v1376, 2147483648
        %v1810 = vsel %vm1808, %v1809, %v1807
        %v1811 = vrsqrt.pop %v1378
        %v1812 = vmul.f32 %v1811, %v1378
        %v1813 = vmul.f32 %v1812, %v1811
        %v1814 = vmul.f32 0.5, %v1813
        %v1815 = vsub.f32 1.5, %v1814
        %v1816 = vmul.f32 %v1811, %v1815
        %v1817 = vmul.f32 %v1378, %v1816
        %vm1818 = vcmp.eq.f32.partialorder %v1378, inf
        %v1819 = vsel %vm1818, %v1378, %v1817
        %vm1820 = vcmp.eq.f32.partialorder %v1378, 0.0
        %v1821 = vand.u32 %v1378, 2147483648
        %v1822 = vsel %vm1820, %v1821, %v1819
        %v1823 = vrsqrt.pop %v1380
        %v1824 = vmul.f32 %v1823, %v1380
        %v1825 = vmul.f32 %v1824, %v1823
        %v1826 = vmul.f32 0.5, %v1825
        %v1827 = vsub.f32 1.5, %v1826
        %v1828 = vmul.f32 %v1823, %v1827
        %v1829 = vmul.f32 %v1380, %v1828
        %vm1830 = vcmp.eq.f32.partialorder %v1380, inf
        %v1831 = vsel %vm1830, %v1380, %v1829
        %vm1832 = vcmp.eq.f32.partialorder %v1380, 0.0
        %v1833 = vand.u32 %v1380, 2147483648
        %v1834 = vsel %vm1832, %v1833, %v1831
        %v1835 = vrsqrt.pop %v1382
        %v1836 = vmul.f32 %v1835, %v1382
        %v1837 = vmul.f32 %v1836, %v1835
        %v1838 = vmul.f32 0.5, %v1837
        %v1839 = vsub.f32 1.5, %v1838
        %v1840 = vmul.f32 %v1835, %v1839
        %v1841 = vmul.f32 %v1382, %v1840
        %vm1842 = vcmp.eq.f32.partialorder %v1382, inf
        %v1843 = vsel %vm1842, %v1382, %v1841
        %vm1844 = vcmp.eq.f32.partialorder %v1382, 0.0
        %v1845 = vand.u32 %v1382, 2147483648
        %v1846 = vsel %vm1844, %v1845, %v1843
        %v1847 = vadd.f32 %v1666, 1e-06
        %v1848 = vadd.f32 %v1678, 1e-06
        %v1849 = vadd.f32 %v1690, 1e-06
        %v1850 = vadd.f32 %v1702, 1e-06
        %v1851 = vadd.f32 %v1714, 1e-06
        %v1852 = vadd.f32 %v1726, 1e-06
        %v1853 = vadd.f32 %v1738, 1e-06
        %v1854 = vadd.f32 %v1750, 1e-06
        %v1855 = vadd.f32 %v1762, 1e-06
        %v1856 = vadd.f32 %v1774, 1e-06
        %v1857 = vadd.f32 %v1786, 1e-06
        %v1858 = vadd.f32 %v1798, 1e-06
        %v1859 = vadd.f32 %v1810, 1e-06
        %v1860 = vadd.f32 %v1822, 1e-06
        %v1861 = vadd.f32 %v1834, 1e-06
        %v1862 = vadd.f32 %v1846, 1e-06
        %v1863 = vrcp.pop %v1847
        %v1864 = vmul.f32 %v1847, %v1863
        %v1865 = vsub.f32 1.0, %v1864
        %v1866 = vmul.f32 %v1863, %v1865
        %v1867 = vadd.f32 %v1863, %v1866
        %vm1868 = vweird.f32 %v1847
        %vm1869 = vweird.f32 %v1863
        %vm1870 = vmor %vm1868, %vm1869
        %v1871 = vsel %vm1870, %v1863, %v1867
        %v1872 = vand.u32 2147483647, %v1847
        %vm1873 = vcmp.eq.f32.partialorder %v1872, 8.507059e+37
        %v1874 = vand.u32 %v1847, 2147483648
        %v1875 = vor.u32 1.1754944e-38, %v1874
        %v1876 = vsel %vm1873, %v1875, %v1871
        %v1877 = vrcp.pop %v1848
        %v1878 = vmul.f32 %v1848, %v1877
        %v1879 = vsub.f32 1.0, %v1878
        %v1880 = vmul.f32 %v1877, %v1879
        %v1881 = vadd.f32 %v1877, %v1880
        %vm1882 = vweird.f32 %v1848
        %vm1883 = vweird.f32 %v1877
        %vm1884 = vmor %vm1882, %vm1883
        %v1885 = vsel %vm1884, %v1877, %v1881
        %v1886 = vand.u32 2147483647, %v1848
        %vm1887 = vcmp.eq.f32.partialorder %v1886, 8.507059e+37
        %v1888 = vand.u32 %v1848, 2147483648
        %v1889 = vor.u32 1.1754944e-38, %v1888
        %v1890 = vsel %vm1887, %v1889, %v1885
        %v1891 = vrcp.pop %v1849
        %v1892 = vmul.f32 %v1849, %v1891
        %v1893 = vsub.f32 1.0, %v1892
        %v1894 = vmul.f32 %v1891, %v1893
        %v1895 = vadd.f32 %v1891, %v1894
        %vm1896 = vweird.f32 %v1849
        %vm1897 = vweird.f32 %v1891
        %vm1898 = vmor %vm1896, %vm1897
        %v1899 = vsel %vm1898, %v1891, %v1895
        %v1900 = vand.u32 2147483647, %v1849
        %vm1901 = vcmp.eq.f32.partialorder %v1900, 8.507059e+37
        %v1902 = vand.u32 %v1849, 2147483648
        %v1903 = vor.u32 1.1754944e-38, %v1902
        %v1904 = vsel %vm1901, %v1903, %v1899
        %v1905 = vrcp.pop %v1850
        %v1906 = vmul.f32 %v1850, %v1905
        %v1907 = vsub.f32 1.0, %v1906
        %v1908 = vmul.f32 %v1905, %v1907
        %v1909 = vadd.f32 %v1905, %v1908
        %vm1910 = vweird.f32 %v1850
        %vm1911 = vweird.f32 %v1905
        %vm1912 = vmor %vm1910, %vm1911
        %v1913 = vsel %vm1912, %v1905, %v1909
        %v1914 = vand.u32 2147483647, %v1850
        %vm1915 = vcmp.eq.f32.partialorder %v1914, 8.507059e+37
        %v1916 = vand.u32 %v1850, 2147483648
        %v1917 = vor.u32 1.1754944e-38, %v1916
        %v1918 = vsel %vm1915, %v1917, %v1913
        %v1919 = vrcp.pop %v1851
        %v1920 = vmul.f32 %v1851, %v1919
        %v1921 = vsub.f32 1.0, %v1920
        %v1922 = vmul.f32 %v1919, %v1921
        %v1923 = vadd.f32 %v1919, %v1922
        %vm1924 = vweird.f32 %v1851
        %vm1925 = vweird.f32 %v1919
        %vm1926 = vmor %vm1924, %vm1925
        %v1927 = vsel %vm1926, %v1919, %v1923
        %v1928 = vand.u32 2147483647, %v1851
        %vm1929 = vcmp.eq.f32.partialorder %v1928, 8.507059e+37
        %v1930 = vand.u32 %v1851, 2147483648
        %v1931 = vor.u32 1.1754944e-38, %v1930
        %v1932 = vsel %vm1929, %v1931, %v1927
        %v1933 = vrcp.pop %v1852
        %v1934 = vmul.f32 %v1852, %v1933
        %v1935 = vsub.f32 1.0, %v1934
        %v1936 = vmul.f32 %v1933, %v1935
        %v1937 = vadd.f32 %v1933, %v1936
        %vm1938 = vweird.f32 %v1852
        %vm1939 = vweird.f32 %v1933
        %vm1940 = vmor %vm1938, %vm1939
        %v1941 = vsel %vm1940, %v1933, %v1937
        %v1942 = vand.u32 2147483647, %v1852
        %vm1943 = vcmp.eq.f32.partialorder %v1942, 8.507059e+37
        %v1944 = vand.u32 %v1852, 2147483648
        %v1945 = vor.u32 1.1754944e-38, %v1944
        %v1946 = vsel %vm1943, %v1945, %v1941
        %v1947 = vrcp.pop %v1853
        %v1948 = vmul.f32 %v1853, %v1947
        %v1949 = vsub.f32 1.0, %v1948
        %v1950 = vmul.f32 %v1947, %v1949
        %v1951 = vadd.f32 %v1947, %v1950
        %vm1952 = vweird.f32 %v1853
        %vm1953 = vweird.f32 %v1947
        %vm1954 = vmor %vm1952, %vm1953
        %v1955 = vsel %vm1954, %v1947, %v1951
        %v1956 = vand.u32 2147483647, %v1853
        %vm1957 = vcmp.eq.f32.partialorder %v1956, 8.507059e+37
        %v1958 = vand.u32 %v1853, 2147483648
        %v1959 = vor.u32 1.1754944e-38, %v1958
        %v1960 = vsel %vm1957, %v1959, %v1955
        %v1961 = vrcp.pop %v1854
        %v1962 = vmul.f32 %v1854, %v1961
        %v1963 = vsub.f32 1.0, %v1962
        %v1964 = vmul.f32 %v1961, %v1963
        %v1965 = vadd.f32 %v1961, %v1964
        %vm1966 = vweird.f32 %v1854
        %vm1967 = vweird.f32 %v1961
        %vm1968 = vmor %vm1966, %vm1967
        %v1969 = vsel %vm1968, %v1961, %v1965
        %v1970 = vand.u32 2147483647, %v1854
        %vm1971 = vcmp.eq.f32.partialorder %v1970, 8.507059e+37
        %v1972 = vand.u32 %v1854, 2147483648
        %v1973 = vor.u32 1.1754944e-38, %v1972
        %v1974 = vsel %vm1971, %v1973, %v1969
        %v1975 = vrcp.pop %v1855
        %v1976 = vmul.f32 %v1855, %v1975
        %v1977 = vsub.f32 1.0, %v1976
        %v1978 = vmul.f32 %v1975, %v1977
        %v1979 = vadd.f32 %v1975, %v1978
        %vm1980 = vweird.f32 %v1855
        %vm1981 = vweird.f32 %v1975
        %vm1982 = vmor %vm1980, %vm1981
        %v1983 = vsel %vm1982, %v1975, %v1979
        %v1984 = vand.u32 2147483647, %v1855
        %vm1985 = vcmp.eq.f32.partialorder %v1984, 8.507059e+37
        %v1986 = vand.u32 %v1855, 2147483648
        %v1987 = vor.u32 1.1754944e-38, %v1986
        %v1988 = vsel %vm1985, %v1987, %v1983
        %v1989 = vrcp.pop %v1856
        %v1990 = vmul.f32 %v1856, %v1989
        %v1991 = vsub.f32 1.0, %v1990
        %v1992 = vmul.f32 %v1989, %v1991
        %v1993 = vadd.f32 %v1989, %v1992
        %vm1994 = vweird.f32 %v1856
        %vm1995 = vweird.f32 %v1989
        %vm1996 = vmor %vm1994, %vm1995
        %v1997 = vsel %vm1996, %v1989, %v1993
        %v1998 = vand.u32 2147483647, %v1856
        %vm1999 = vcmp.eq.f32.partialorder %v1998, 8.507059e+37
        %v2000 = vand.u32 %v1856, 2147483648
        %v2001 = vor.u32 1.1754944e-38, %v2000
        %v2002 = vsel %vm1999, %v2001, %v1997
        %v2003 = vrcp.pop %v1857
        %v2004 = vmul.f32 %v1857, %v2003
        %v2005 = vsub.f32 1.0, %v2004
        %v2006 = vmul.f32 %v2003, %v2005
        %v2007 = vadd.f32 %v2003, %v2006
        %vm2008 = vweird.f32 %v1857
        %vm2009 = vweird.f32 %v2003
        %vm2010 = vmor %vm2008, %vm2009
        %v2011 = vsel %vm2010, %v2003, %v2007
        %v2012 = vand.u32 2147483647, %v1857
        %vm2013 = vcmp.eq.f32.partialorder %v2012, 8.507059e+37
        %v2014 = vand.u32 %v1857, 2147483648
        %v2015 = vor.u32 1.1754944e-38, %v2014
        %v2016 = vsel %vm2013, %v2015, %v2011
        %v2017 = vrcp.pop %v1858
        %v2018 = vmul.f32 %v1858, %v2017
        %v2019 = vsub.f32 1.0, %v2018
        %v2020 = vmul.f32 %v2017, %v2019
        %v2021 = vadd.f32 %v2017, %v2020
        %vm2022 = vweird.f32 %v1858
        %vm2023 = vweird.f32 %v2017
        %vm2024 = vmor %vm2022, %vm2023
        %v2025 = vsel %vm2024, %v2017, %v2021
        %v2026 = vand.u32 2147483647, %v1858
        %vm2027 = vcmp.eq.f32.partialorder %v2026, 8.507059e+37
        %v2028 = vand.u32 %v1858, 2147483648
        %v2029 = vor.u32 1.1754944e-38, %v2028
        %v2030 = vsel %vm2027, %v2029, %v2025
        %v2031 = vrcp.pop %v1859
        %v2032 = vmul.f32 %v1859, %v2031
        %v2033 = vsub.f32 1.0, %v2032
        %v2034 = vmul.f32 %v2031, %v2033
        %v2035 = vadd.f32 %v2031, %v2034
        %vm2036 = vweird.f32 %v1859
        %vm2037 = vweird.f32 %v2031
        %vm2038 = vmor %vm2036, %vm2037
        %v2039 = vsel %vm2038, %v2031, %v2035
        %v2040 = vand.u32 2147483647, %v1859
        %vm2041 = vcmp.eq.f32.partialorder %v2040, 8.507059e+37
        %v2042 = vand.u32 %v1859, 2147483648
        %v2043 = vor.u32 1.1754944e-38, %v2042
        %v2044 = vsel %vm2041, %v2043, %v2039
        %v2045 = vrcp.pop %v1860
        %v2046 = vmul.f32 %v1860, %v2045
        %v2047 = vsub.f32 1.0, %v2046
        %v2048 = vmul.f32 %v2045, %v2047
        %v2049 = vadd.f32 %v2045, %v2048
        %vm2050 = vweird.f32 %v1860
        %vm2051 = vweird.f32 %v2045
        %vm2052 = vmor %vm2050, %vm2051
        %v2053 = vsel %vm2052, %v2045, %v2049
        %v2054 = vand.u32 2147483647, %v1860
        %vm2055 = vcmp.eq.f32.partialorder %v2054, 8.507059e+37
        %v2056 = vand.u32 %v1860, 2147483648
        %v2057 = vor.u32 1.1754944e-38, %v2056
        %v2058 = vsel %vm2055, %v2057, %v2053
        %v2059 = vrcp.pop %v1861
        %v2060 = vmul.f32 %v1861, %v2059
        %v2061 = vsub.f32 1.0, %v2060
        %v2062 = vmul.f32 %v2059, %v2061
        %v2063 = vadd.f32 %v2059, %v2062
        %vm2064 = vweird.f32 %v1861
        %vm2065 = vweird.f32 %v2059
        %vm2066 = vmor %vm2064, %vm2065
        %v2067 = vsel %vm2066, %v2059, %v2063
        %v2068 = vand.u32 2147483647, %v1861
        %vm2069 = vcmp.eq.f32.partialorder %v2068, 8.507059e+37
        %v2070 = vand.u32 %v1861, 2147483648
        %v2071 = vor.u32 1.1754944e-38, %v2070
        %v2072 = vsel %vm2069, %v2071, %v2067
        %v2073 = vrcp.pop %v1862
        %v2074 = vmul.f32 %v1862, %v2073
        %v2075 = vsub.f32 1.0, %v2074
        %v2076 = vmul.f32 %v2073, %v2075
        %v2077 = vadd.f32 %v2073, %v2076
        %vm2078 = vweird.f32 %v1862
        %vm2079 = vweird.f32 %v2073
        %vm2080 = vmor %vm2078, %vm2079
        %v2081 = vsel %vm2080, %v2073, %v2077
        %v2082 = vand.u32 2147483647, %v1862
        %vm2083 = vcmp.eq.f32.partialorder %v2082, 8.507059e+37
        %v2084 = vand.u32 %v1862, 2147483648
        %v2085 = vor.u32 1.1754944e-38, %v2084
        %v2086 = vsel %vm2083, %v2085, %v2081
        %v2087 = vsel %vm1639, %v1876, 0.0
        %v2088 = vsel %vm1640, %v1890, 0.0
        %v2089 = vsel %vm1641, %v1904, 0.0
        %v2090 = vsel %vm1642, %v1918, 0.0
        %v2091 = vsel %vm1643, %v1932, 0.0
        %v2092 = vsel %vm1644, %v1946, 0.0
        %v2093 = vsel %vm1645, %v1960, 0.0
        %v2094 = vsel %vm1646, %v1974, 0.0
        %v2095 = vsel %vm1647, %v1988, 0.0
        %v2096 = vsel %vm1648, %v2002, 0.0
        %v2097 = vsel %vm1649, %v2016, 0.0
        %v2098 = vsel %vm1650, %v2030, 0.0
        %v2099 = vsel %vm1651, %v2044, 0.0
        %v2100 = vsel %vm1652, %v2058, 0.0
        %v2101 = vsel %vm1653, %v2072, 0.0
        %v2102 = vsel %vm1654, %v2086, 0.0
        %v2103 = vadd.f32 %v1319, %v2087
        %v2104 = vadd.f32 %v1320, %v2088
        %v2105 = vadd.f32 %v1321, %v2089
        %v2106 = vadd.f32 %v1322, %v2090
        %v2107 = vadd.f32 %v1323, %v2091
        %v2108 = vadd.f32 %v1324, %v2092
        %v2109 = vadd.f32 %v1325, %v2093
        %v2110 = vadd.f32 %v1326, %v2094
        %v2111 = vadd.f32 %v1327, %v2095
        %v2112 = vadd.f32 %v1328, %v2096
        %v2113 = vadd.f32 %v1329, %v2097
        %v2114 = vadd.f32 %v1330, %v2098
        %v2115 = vadd.f32 %v1331, %v2099
        %v2116 = vadd.f32 %v1332, %v2100
        %v2117 = vadd.f32 %v1333, %v2101
        %v2118 = vadd.f32 %v1334, %v2102
        %v2119 = vadd.f32 %v1092, %v1876
        %v2120 = vadd.f32 %v1106, %v1890
        %v2121 = vadd.f32 %v1120, %v1904
        %v2122 = vadd.f32 %v1134, %v1918
        %v2123 = vadd.f32 %v1148, %v1932
        %v2124 = vadd.f32 %v1162, %v1946
        %v2125 = vadd.f32 %v1176, %v1960
        %v2126 = vadd.f32 %v1190, %v1974
        %v2127 = vadd.f32 %v1204, %v1988
        %v2128 = vadd.f32 %v1218, %v2002
        %v2129 = vadd.f32 %v1232, %v2016
        %v2130 = vadd.f32 %v1246, %v2030
        %v2131 = vadd.f32 %v1260, %v2044
        %v2132 = vadd.f32 %v1274, %v2058
        %v2133 = vadd.f32 %v1288, %v2072
        %v2134 = vadd.f32 %v1302, %v2086
        %v2135 = vrcp.pop %v2119
        %v2136 = vmul.f32 %v2119, %v2135
        %v2137 = vsub.f32 1.0, %v2136
        %v2138 = vmul.f32 %v2135, %v2137
        %v2139 = vadd.f32 %v2135, %v2138
        %vm2140 = vweird.f32 %v2119
        %vm2141 = vweird.f32 %v2135
        %vm2142 = vmor %vm2140, %vm2141
        %v2143 = vsel %vm2142, %v2135, %v2139
        %v2144 = vand.u32 2147483647, %v2119
        %vm2145 = vcmp.eq.f32.partialorder %v2144, 8.507059e+37
        %v2146 = vand.u32 %v2119, 2147483648
        %v2147 = vor.u32 1.1754944e-38, %v2146
        %v2148 = vsel %vm2145, %v2147, %v2143
        %v2149 = vrcp.pop %v2120
        %v2150 = vmul.f32 %v2120, %v2149
        %v2151 = vsub.f32 1.0, %v2150
        %v2152 = vmul.f32 %v2149, %v2151
        %v2153 = vadd.f32 %v2149, %v2152
        %vm2154 = vweird.f32 %v2120
        %vm2155 = vweird.f32 %v2149
        %vm2156 = vmor %vm2154, %vm2155
        %v2157 = vsel %vm2156, %v2149, %v2153
        %v2158 = vand.u32 2147483647, %v2120
        %vm2159 = vcmp.eq.f32.partialorder %v2158, 8.507059e+37
        %v2160 = vand.u32 %v2120, 2147483648
        %v2161 = vor.u32 1.1754944e-38, %v2160
        %v2162 = vsel %vm2159, %v2161, %v2157
        %v2163 = vrcp.pop %v2121
        %v2164 = vmul.f32 %v2121, %v2163
        %v2165 = vsub.f32 1.0, %v2164
        %v2166 = vmul.f32 %v2163, %v2165
        %v2167 = vadd.f32 %v2163, %v2166
        %vm2168 = vweird.f32 %v2121
        %vm2169 = vweird.f32 %v2163
        %vm2170 = vmor %vm2168, %vm2169
        %v2171 = vsel %vm2170, %v2163, %v2167
        %v2172 = vand.u32 2147483647, %v2121
        %vm2173 = vcmp.eq.f32.partialorder %v2172, 8.507059e+37
        %v2174 = vand.u32 %v2121, 2147483648
        %v2175 = vor.u32 1.1754944e-38, %v2174
        %v2176 = vsel %vm2173, %v2175, %v2171
        %v2177 = vrcp.pop %v2122
        %v2178 = vmul.f32 %v2122, %v2177
        %v2179 = vsub.f32 1.0, %v2178
        %v2180 = vmul.f32 %v2177, %v2179
        %v2181 = vadd.f32 %v2177, %v2180
        %vm2182 = vweird.f32 %v2122
        %vm2183 = vweird.f32 %v2177
        %vm2184 = vmor %vm2182, %vm2183
        %v2185 = vsel %vm2184, %v2177, %v2181
        %v2186 = vand.u32 2147483647, %v2122
        %vm2187 = vcmp.eq.f32.partialorder %v2186, 8.507059e+37
        %v2188 = vand.u32 %v2122, 2147483648
        %v2189 = vor.u32 1.1754944e-38, %v2188
        %v2190 = vsel %vm2187, %v2189, %v2185
        %v2191 = vrcp.pop %v2123
        %v2192 = vmul.f32 %v2123, %v2191
        %v2193 = vsub.f32 1.0, %v2192
        %v2194 = vmul.f32 %v2191, %v2193
        %v2195 = vadd.f32 %v2191, %v2194
        %vm2196 = vweird.f32 %v2123
        %vm2197 = vweird.f32 %v2191
        %vm2198 = vmor %vm2196, %vm2197
        %v2199 = vsel %vm2198, %v2191, %v2195
        %v2200 = vand.u32 2147483647, %v2123
        %vm2201 = vcmp.eq.f32.partialorder %v2200, 8.507059e+37
        %v2202 = vand.u32 %v2123, 2147483648
        %v2203 = vor.u32 1.1754944e-38, %v2202
        %v2204 = vsel %vm2201, %v2203, %v2199
        %v2205 = vrcp.pop %v2124
        %v2206 = vmul.f32 %v2124, %v2205
        %v2207 = vsub.f32 1.0, %v2206
        %v2208 = vmul.f32 %v2205, %v2207
        %v2209 = vadd.f32 %v2205, %v2208
        %vm2210 = vweird.f32 %v2124
        %vm2211 = vweird.f32 %v2205
        %vm2212 = vmor %vm2210, %vm2211
        %v2213 = vsel %vm2212, %v2205, %v2209
        %v2214 = vand.u32 2147483647, %v2124
        %vm2215 = vcmp.eq.f32.partialorder %v2214, 8.507059e+37
        %v2216 = vand.u32 %v2124, 2147483648
        %v2217 = vor.u32 1.1754944e-38, %v2216
        %v2218 = vsel %vm2215, %v2217, %v2213
        %v2219 = vrcp.pop %v2125
        %v2220 = vmul.f32 %v2125, %v2219
        %v2221 = vsub.f32 1.0, %v2220
        %v2222 = vmul.f32 %v2219, %v2221
        %v2223 = vadd.f32 %v2219, %v2222
        %vm2224 = vweird.f32 %v2125
        %vm2225 = vweird.f32 %v2219
        %vm2226 = vmor %vm2224, %vm2225
        %v2227 = vsel %vm2226, %v2219, %v2223
        %v2228 = vand.u32 2147483647, %v2125
        %vm2229 = vcmp.eq.f32.partialorder %v2228, 8.507059e+37
        %v2230 = vand.u32 %v2125, 2147483648
        %v2231 = vor.u32 1.1754944e-38, %v2230
        %v2232 = vsel %vm2229, %v2231, %v2227
        %v2233 = vrcp.pop %v2126
        %v2234 = vmul.f32 %v2126, %v2233
        %v2235 = vsub.f32 1.0, %v2234
        %v2236 = vmul.f32 %v2233, %v2235
        %v2237 = vadd.f32 %v2233, %v2236
        %vm2238 = vweird.f32 %v2126
        %vm2239 = vweird.f32 %v2233
        %vm2240 = vmor %vm2238, %vm2239
        %v2241 = vsel %vm2240, %v2233, %v2237
        %v2242 = vand.u32 2147483647, %v2126
        %vm2243 = vcmp.eq.f32.partialorder %v2242, 8.507059e+37
        %v2244 = vand.u32 %v2126, 2147483648
        %v2245 = vor.u32 1.1754944e-38, %v2244
        %v2246 = vsel %vm2243, %v2245, %v2241
        %v2247 = vrcp.pop %v2127
        %v2248 = vmul.f32 %v2127, %v2247
        %v2249 = vsub.f32 1.0, %v2248
        %v2250 = vmul.f32 %v2247, %v2249
        %v2251 = vadd.f32 %v2247, %v2250
        %vm2252 = vweird.f32 %v2127
        %vm2253 = vweird.f32 %v2247
        %vm2254 = vmor %vm2252, %vm2253
        %v2255 = vsel %vm2254, %v2247, %v2251
        %v2256 = vand.u32 2147483647, %v2127
        %vm2257 = vcmp.eq.f32.partialorder %v2256, 8.507059e+37
        %v2258 = vand.u32 %v2127, 2147483648
        %v2259 = vor.u32 1.1754944e-38, %v2258
        %v2260 = vsel %vm2257, %v2259, %v2255
        %v2261 = vrcp.pop %v2128
        %v2262 = vmul.f32 %v2128, %v2261
        %v2263 = vsub.f32 1.0, %v2262
        %v2264 = vmul.f32 %v2261, %v2263
        %v2265 = vadd.f32 %v2261, %v2264
        %vm2266 = vweird.f32 %v2128
        %vm2267 = vweird.f32 %v2261
        %vm2268 = vmor %vm2266, %vm2267
        %v2269 = vsel %vm2268, %v2261, %v2265
        %v2270 = vand.u32 2147483647, %v2128
        %vm2271 = vcmp.eq.f32.partialorder %v2270, 8.507059e+37
        %v2272 = vand.u32 %v2128, 2147483648
        %v2273 = vor.u32 1.1754944e-38, %v2272
        %v2274 = vsel %vm2271, %v2273, %v2269
        %v2275 = vrcp.pop %v2129
        %v2276 = vmul.f32 %v2129, %v2275
        %v2277 = vsub.f32 1.0, %v2276
        %v2278 = vmul.f32 %v2275, %v2277
        %v2279 = vadd.f32 %v2275, %v2278
        %vm2280 = vweird.f32 %v2129
        %vm2281 = vweird.f32 %v2275
        %vm2282 = vmor %vm2280, %vm2281
        %v2283 = vsel %vm2282, %v2275, %v2279
        %v2284 = vand.u32 2147483647, %v2129
        %vm2285 = vcmp.eq.f32.partialorder %v2284, 8.507059e+37
        %v2286 = vand.u32 %v2129, 2147483648
        %v2287 = vor.u32 1.1754944e-38, %v2286
        %v2288 = vsel %vm2285, %v2287, %v2283
        %v2289 = vrcp.pop %v2130
        %v2290 = vmul.f32 %v2130, %v2289
        %v2291 = vsub.f32 1.0, %v2290
        %v2292 = vmul.f32 %v2289, %v2291
        %v2293 = vadd.f32 %v2289, %v2292
        %vm2294 = vweird.f32 %v2130
        %vm2295 = vweird.f32 %v2289
        %vm2296 = vmor %vm2294, %vm2295
        %v2297 = vsel %vm2296, %v2289, %v2293
        %v2298 = vand.u32 2147483647, %v2130
        %vm2299 = vcmp.eq.f32.partialorder %v2298, 8.507059e+37
        %v2300 = vand.u32 %v2130, 2147483648
        %v2301 = vor.u32 1.1754944e-38, %v2300
        %v2302 = vsel %vm2299, %v2301, %v2297
        %v2303 = vrcp.pop %v2131
        %v2304 = vmul.f32 %v2131, %v2303
        %v2305 = vsub.f32 1.0, %v2304
        %v2306 = vmul.f32 %v2303, %v2305
        %v2307 = vadd.f32 %v2303, %v2306
        %vm2308 = vweird.f32 %v2131
        %vm2309 = vweird.f32 %v2303
        %vm2310 = vmor %vm2308, %vm2309
        %v2311 = vsel %vm2310, %v2303, %v2307
        %v2312 = vand.u32 2147483647, %v2131
        %vm2313 = vcmp.eq.f32.partialorder %v2312, 8.507059e+37
        %v2314 = vand.u32 %v2131, 2147483648
        %v2315 = vor.u32 1.1754944e-38, %v2314
        %v2316 = vsel %vm2313, %v2315, %v2311
        %v2317 = vrcp.pop %v2132
        %v2318 = vmul.f32 %v2132, %v2317
        %v2319 = vsub.f32 1.0, %v2318
        %v2320 = vmul.f32 %v2317, %v2319
        %v2321 = vadd.f32 %v2317, %v2320
        %vm2322 = vweird.f32 %v2132
        %vm2323 = vweird.f32 %v2317
        %vm2324 = vmor %vm2322, %vm2323
        %v2325 = vsel %vm2324, %v2317, %v2321
        %v2326 = vand.u32 2147483647, %v2132
        %vm2327 = vcmp.eq.f32.partialorder %v2326, 8.507059e+37
        %v2328 = vand.u32 %v2132, 2147483648
        %v2329 = vor.u32 1.1754944e-38, %v2328
        %v2330 = vsel %vm2327, %v2329, %v2325
        %v2331 = vrcp.pop %v2133
        %v2332 = vmul.f32 %v2133, %v2331
        %v2333 = vsub.f32 1.0, %v2332
        %v2334 = vmul.f32 %v2331, %v2333
        %v2335 = vadd.f32 %v2331, %v2334
        %vm2336 = vweird.f32 %v2133
        %vm2337 = vweird.f32 %v2331
        %vm2338 = vmor %vm2336, %vm2337
        %v2339 = vsel %vm2338, %v2331, %v2335
        %v2340 = vand.u32 2147483647, %v2133
        %vm2341 = vcmp.eq.f32.partialorder %v2340, 8.507059e+37
        %v2342 = vand.u32 %v2133, 2147483648
        %v2343 = vor.u32 1.1754944e-38, %v2342
        %v2344 = vsel %vm2341, %v2343, %v2339
        %v2345 = vrcp.pop %v2134
        %v2346 = vmul.f32 %v2134, %v2345
        %v2347 = vsub.f32 1.0, %v2346
        %v2348 = vmul.f32 %v2345, %v2347
        %v2349 = vadd.f32 %v2345, %v2348
        %vm2350 = vweird.f32 %v2134
        %vm2351 = vweird.f32 %v2345
        %vm2352 = vmor %vm2350, %vm2351
        %v2353 = vsel %vm2352, %v2345, %v2349
        %v2354 = vand.u32 2147483647, %v2134
        %vm2355 = vcmp.eq.f32.partialorder %v2354, 8.507059e+37
        %v2356 = vand.u32 %v2134, 2147483648
        %v2357 = vor.u32 1.1754944e-38, %v2356
        %v2358 = vsel %vm2355, %v2357, %v2353
        %v2360 = vperm.slane %v319, 0
        %v2362 = vmul.f32 %v2103, %v2360
        %v2363 = vmul.f32 %v2104, %v2360
        %v2364 = vmul.f32 %v2105, %v2360
        %v2365 = vmul.f32 %v2106, %v2360
        %v2366 = vmul.f32 %v2107, %v2360
        %v2367 = vmul.f32 %v2108, %v2360
        %v2368 = vmul.f32 %v2109, %v2360
        %v2369 = vmul.f32 %v2110, %v2360
        %v2370 = vmul.f32 %v2111, %v2360
        %v2371 = vmul.f32 %v2112, %v2360
        %v2372 = vmul.f32 %v2113, %v2360
        %v2373 = vmul.f32 %v2114, %v2360
        %v2374 = vmul.f32 %v2115, %v2360
        %v2375 = vmul.f32 %v2116, %v2360
        %v2376 = vmul.f32 %v2117, %v2360
        %v2377 = vmul.f32 %v2118, %v2360
        %2378 = vadd.xlane.f32.xlu0 %v2362
        %v2379 = vpop.xlane.xlu0 %2378
        %2380 = vadd.xlane.f32.xlu0 %v2363
        %v2381 = vpop.xlane.xlu0 %2380
        %2382 = vadd.xlane.f32.xlu0 %v2364
        %v2383 = vpop.xlane.xlu0 %2382
        %2384 = vadd.xlane.f32.xlu0 %v2365
        %v2385 = vpop.xlane.xlu0 %2384
        %2386 = vadd.xlane.f32.xlu0 %v2366
        %v2387 = vpop.xlane.xlu0 %2386
        %2388 = vadd.xlane.f32.xlu0 %v2367
        %v2389 = vpop.xlane.xlu0 %2388
        %2390 = vadd.xlane.f32.xlu0 %v2368
        %v2391 = vpop.xlane.xlu0 %2390
        %2392 = vadd.xlane.f32.xlu0 %v2369
        %v2393 = vpop.xlane.xlu0 %2392
        %2394 = vadd.xlane.f32.xlu0 %v2370
        %v2395 = vpop.xlane.xlu0 %2394
        %2396 = vadd.xlane.f32.xlu0 %v2371
        %v2397 = vpop.xlane.xlu0 %2396
        %2398 = vadd.xlane.f32.xlu0 %v2372
        %v2399 = vpop.xlane.xlu0 %2398
        %2400 = vadd.xlane.f32.xlu0 %v2373
        %v2401 = vpop.xlane.xlu0 %2400
        %2402 = vadd.xlane.f32.xlu0 %v2374
        %v2403 = vpop.xlane.xlu0 %2402
        %2404 = vadd.xlane.f32.xlu0 %v2375
        %v2405 = vpop.xlane.xlu0 %2404
        %2406 = vadd.xlane.f32.xlu0 %v2376
        %v2407 = vpop.xlane.xlu0 %2406
        %2408 = vadd.xlane.f32.xlu0 %v2377
        %v2409 = vpop.xlane.xlu0 %2408
        %v2410 = vmul.f32 %v2379, %v2148
        %v2411 = vmul.f32 %v2381, %v2162
        %v2412 = vmul.f32 %v2383, %v2176
        %v2413 = vmul.f32 %v2385, %v2190
        %v2414 = vmul.f32 %v2387, %v2204
        %v2415 = vmul.f32 %v2389, %v2218
        %v2416 = vmul.f32 %v2391, %v2232
        %v2417 = vmul.f32 %v2393, %v2246
        %v2418 = vmul.f32 %v2395, %v2260
        %v2419 = vmul.f32 %v2397, %v2274
        %v2420 = vmul.f32 %v2399, %v2288
        %v2421 = vmul.f32 %v2401, %v2302
        %v2422 = vmul.f32 %v2403, %v2316
        %v2423 = vmul.f32 %v2405, %v2330
        %v2424 = vmul.f32 %v2407, %v2344
        %v2425 = vmul.f32 %v2409, %v2358
        %vm2426 = vcmask 7168
        %v2427 = vsel %vm2426, %v1092, %v1876
        %v2428 = vsel %vm2426, %v1106, %v1890
        %v2429 = vsel %vm2426, %v1120, %v1904
        %v2430 = vsel %vm2426, %v1134, %v1918
        %v2431 = vsel %vm2426, %v1148, %v1932
        %v2432 = vsel %vm2426, %v1162, %v1946
        %v2433 = vsel %vm2426, %v1176, %v1960
        %v2434 = vsel %vm2426, %v1190, %v1974
        %v2435 = vsel %vm2426, %v1204, %v1988
        %v2436 = vsel %vm2426, %v1218, %v2002
        %v2437 = vsel %vm2426, %v1232, %v2016
        %v2438 = vsel %vm2426, %v1246, %v2030
        %v2439 = vsel %vm2426, %v1260, %v2044
        %v2440 = vsel %vm2426, %v1274, %v2058
        %v2441 = vsel %vm2426, %v1288, %v2072
        %v2442 = vsel %vm2426, %v1302, %v2086
        %v2443 = vmul.f32 %v2427, %v2148
        %v2444 = vmul.f32 %v2428, %v2162
        %v2445 = vmul.f32 %v2429, %v2176
        %v2446 = vmul.f32 %v2430, %v2190
        %v2447 = vmul.f32 %v2431, %v2204
        %v2448 = vmul.f32 %v2432, %v2218
        %v2449 = vmul.f32 %v2433, %v2232
        %v2450 = vmul.f32 %v2434, %v2246
        %v2451 = vmul.f32 %v2435, %v2260
        %v2452 = vmul.f32 %v2436, %v2274
        %v2453 = vmul.f32 %v2437, %v2288
        %v2454 = vmul.f32 %v2438, %v2302
        %v2455 = vmul.f32 %v2439, %v2316
        %v2456 = vmul.f32 %v2440, %v2330
        %v2457 = vmul.f32 %v2441, %v2344
        %v2458 = vmul.f32 %v2442, %v2358
        %v2459 = vsel %vm2426, %v644, %v1428
        %v2460 = vsel %vm2426, %v658, %v1442
        %v2461 = vsel %vm2426, %v672, %v1456
        %v2462 = vsel %vm2426, %v686, %v1470
        %v2463 = vsel %vm2426, %v700, %v1484
        %v2464 = vsel %vm2426, %v714, %v1498
        %v2465 = vsel %vm2426, %v728, %v1512
        %v2466 = vsel %vm2426, %v742, %v1526
        %v2467 = vsel %vm2426, %v756, %v1540
        %v2468 = vsel %vm2426, %v770, %v1554
        %v2469 = vsel %vm2426, %v784, %v1568
        %v2470 = vsel %vm2426, %v798, %v1582
        %v2471 = vsel %vm2426, %v812, %v1596
        %v2472 = vsel %vm2426, %v826, %v1610
        %v2473 = vsel %vm2426, %v840, %v1624
        %v2474 = vsel %vm2426, %v854, %v1638
        %2475 = vxpose.xlu0.b32.start [1/16] %v2410, 128
        %2476 = vxpose.xlu0.b32.cont [2/16] %v2411, 128
        %2477 = vxpose.xlu0.b32.cont [3/16] %v2412, 128
        %2478 = vxpose.xlu0.b32.cont [4/16] %v2413, 128
        %2479 = vxpose.xlu0.b32.cont [5/16] %v2414, 128
        %2480 = vxpose.xlu0.b32.cont [6/16] %v2415, 128
        %2481 = vxpose.xlu0.b32.cont [7/16] %v2416, 128
        %2482 = vxpose.xlu0.b32.cont [8/16] %v2417, 128
        %2483 = vxpose.xlu0.b32.cont [9/16] %v2418, 128
        %2484 = vxpose.xlu0.b32.cont [10/16] %v2419, 128
        %2485 = vxpose.xlu0.b32.cont [11/16] %v2420, 128
        %2486 = vxpose.xlu0.b32.cont [12/16] %v2421, 128
        %2487 = vxpose.xlu0.b32.cont [13/16] %v2422, 128
        %2488 = vxpose.xlu0.b32.cont [14/16] %v2423, 128
        %2489 = vxpose.xlu0.b32.cont [15/16] %v2424, 128
        %2490 = vxpose.xlu0.b32.end [16/16] %v2425, 128
        %v2491 = vpop.trf.xlu0
        %v2492 = vpop.trf.xlu0
        %v2493 = vpop.trf.xlu0
        %v2494 = vpop.trf.xlu0
        %v2495 = vpop.trf.xlu0
        %v2496 = vpop.trf.xlu0
        %v2497 = vpop.trf.xlu0
        %v2498 = vpop.trf.xlu0
        %v2499 = vpop.trf.xlu0
        %v2500 = vpop.trf.xlu0
        %v2501 = vpop.trf.xlu0
        %v2502 = vpop.trf.xlu0
        %v2503 = vpop.trf.xlu0
        %v2504 = vpop.trf.xlu0
        %v2505 = vpop.trf.xlu0
        %v2506 = vpop.trf.xlu0
        %2507 = vst [vmem:[%s276] sm:$0x1] %v2491
        %2508 = vxpose.xlu0.b32.start [1/16] %v2443, 128
        %2509 = vxpose.xlu0.b32.cont [2/16] %v2444, 128
        %2510 = vxpose.xlu0.b32.cont [3/16] %v2445, 128
        %2511 = vxpose.xlu0.b32.cont [4/16] %v2446, 128
        %2512 = vxpose.xlu0.b32.cont [5/16] %v2447, 128
        %2513 = vxpose.xlu0.b32.cont [6/16] %v2448, 128
        %2514 = vxpose.xlu0.b32.cont [7/16] %v2449, 128
        %2515 = vxpose.xlu0.b32.cont [8/16] %v2450, 128
        %2516 = vxpose.xlu0.b32.cont [9/16] %v2451, 128
        %2517 = vxpose.xlu0.b32.cont [10/16] %v2452, 128
        %2518 = vxpose.xlu0.b32.cont [11/16] %v2453, 128
        %2519 = vxpose.xlu0.b32.cont [12/16] %v2454, 128
        %2520 = vxpose.xlu0.b32.cont [13/16] %v2455, 128
        %2521 = vxpose.xlu0.b32.cont [14/16] %v2456, 128
        %2522 = vxpose.xlu0.b32.cont [15/16] %v2457, 128
        %2523 = vxpose.xlu0.b32.end [16/16] %v2458, 128
        %v2524 = vpop.trf.xlu0
        %v2525 = vpop.trf.xlu0
        %v2526 = vpop.trf.xlu0
        %v2527 = vpop.trf.xlu0
        %v2528 = vpop.trf.xlu0
        %v2529 = vpop.trf.xlu0
        %v2530 = vpop.trf.xlu0
        %v2531 = vpop.trf.xlu0
        %v2532 = vpop.trf.xlu0
        %v2533 = vpop.trf.xlu0
        %v2534 = vpop.trf.xlu0
        %v2535 = vpop.trf.xlu0
        %v2536 = vpop.trf.xlu0
        %v2537 = vpop.trf.xlu0
        %v2538 = vpop.trf.xlu0
        %v2539 = vpop.trf.xlu0
        %2540 = vst [vmem:[%s283] sm:$0x3] %v2524
        %2541 = vxpose.xlu0.b32.start [1/16] %v2459, 128
        %2542 = vxpose.xlu0.b32.cont [2/16] %v2460, 128
        %2543 = vxpose.xlu0.b32.cont [3/16] %v2461, 128
        %2544 = vxpose.xlu0.b32.cont [4/16] %v2462, 128
        %2545 = vxpose.xlu0.b32.cont [5/16] %v2463, 128
        %2546 = vxpose.xlu0.b32.cont [6/16] %v2464, 128
        %2547 = vxpose.xlu0.b32.cont [7/16] %v2465, 128
        %2548 = vxpose.xlu0.b32.cont [8/16] %v2466, 128
        %2549 = vxpose.xlu0.b32.cont [9/16] %v2467, 128
        %2550 = vxpose.xlu0.b32.cont [10/16] %v2468, 128
        %2551 = vxpose.xlu0.b32.cont [11/16] %v2469, 128
        %2552 = vxpose.xlu0.b32.cont [12/16] %v2470, 128
        %2553 = vxpose.xlu0.b32.cont [13/16] %v2471, 128
        %2554 = vxpose.xlu0.b32.cont [14/16] %v2472, 128
        %2555 = vxpose.xlu0.b32.cont [15/16] %v2473, 128
        %2556 = vxpose.xlu0.b32.end [16/16] %v2474, 128
        %v2557 = vpop.trf.xlu0
        %v2558 = vpop.trf.xlu0
        %v2559 = vpop.trf.xlu0
        %v2560 = vpop.trf.xlu0
        %v2561 = vpop.trf.xlu0
        %v2562 = vpop.trf.xlu0
        %v2563 = vpop.trf.xlu0
        %v2564 = vpop.trf.xlu0
        %v2565 = vpop.trf.xlu0
        %v2566 = vpop.trf.xlu0
        %v2567 = vpop.trf.xlu0
        %v2568 = vpop.trf.xlu0
        %v2569 = vpop.trf.xlu0
        %v2570 = vpop.trf.xlu0
        %v2571 = vpop.trf.xlu0
        %v2572 = vpop.trf.xlu0
        %2573 = vst [vmem:[%s290] sm:$0x3] %v2557
        %s2574 = sand.u32 %s137, 1
        %s2575 = scalar_lea.sflag [#allocation3], %s2574
        %s2576 = sand.u32 %s137, 1
        %s2577 = scalar_lea.vmem [#allocation2], %s2576
        %s2578 = sand.u32 %s24, 1
        %s2579 = scalar_lea.sflag [#allocation5], %s2578
        %s2580 = sand.u32 %s165, 1
        %s2581 = smul.addr %s2580, 2
        %s2582 = scalar_lea.vmem [#allocation4], %s2581
        %s2583 = sand.u32 %s24, 1
        %s2584 = scalar_lea.sflag [#allocation5], %s2583
        %s2585 = sand.u32 %s193, 1
        %s2586 = smul.addr %s2585, 2
        %s2587 = scalar_lea.vmem [#allocation6], %s2586
        // Predicated region
        $region37: #{tpu_custom_call.1} parent=35 // pred_check
          %p2588 = pneg %p147
        $region38: #{tpu_custom_call.1} parent=35 // pred_check_branch
          %2590 = sbr.rel (%p2588) target = $region40
        $region39: #{tpu_custom_call.1} parent=35 // pred_region
          %2592 = vsyncadd %s2575, 0
          %s2593 = sadd.s32 %s29, %s28
          %s2594 = scalar_lea.hbm %s4, %s2593
          %s2596 = sshll.u32 %s2577, 4
          %s2597 = int_to_ptr.vmem [resolvable:$true] %s2596
          %s2598 = sshll.u32 %s2594, 4
          %s2599 = int_to_ptr.hbm [resolvable:$true] %s2598
          %2601 = dma.vmem_to_hbm [thread:$0]  %s2597, 16, %s2599, %s2575
        $region40: #{tpu_custom_call.1} parent=35 // pred_fallthru
          _
        // Predicated region
        $region41: #{tpu_custom_call.1} parent=35 // pred_check
          %p2602 = pneg %p175
        $region42: #{tpu_custom_call.1} parent=35 // pred_check_branch
          %2604 = sbr.rel (%p2602) target = $region44
        $region43: #{tpu_custom_call.1} parent=35 // pred_region
          %2606 = vsyncadd %s2579, 0
          %s2607 = sadd.s32 %s29, %s28
          %s2608 = smul.addr %s2607, 2
          %s2609 = scalar_lea.hbm %s5, %s2608
          %s2611 = sshll.u32 %s2582, 4
          %s2612 = int_to_ptr.vmem [resolvable:$true] %s2611
          %s2613 = sshll.u32 %s2609, 4
          %s2614 = int_to_ptr.hbm [resolvable:$true] %s2613
          %2616 = dma.vmem_to_hbm [thread:$0]  %s2612, 32, %s2614, %s2579
        $region44: #{tpu_custom_call.1} parent=35 // pred_fallthru
          _
        // Predicated region
        $region45: #{tpu_custom_call.1} parent=35 // pred_check
          %p2617 = pneg %p203
        $region46: #{tpu_custom_call.1} parent=35 // pred_check_branch
          %2619 = sbr.rel (%p2617) target = $region48
        $region47: #{tpu_custom_call.1} parent=35 // pred_region
          %2621 = vsyncadd %s2584, 0
          %s2622 = sadd.s32 %s29, %s28
          %s2623 = smul.addr %s2622, 2
          %s2624 = scalar_lea.hbm %s6, %s2623
          %s2626 = sshll.u32 %s2587, 4
          %s2627 = int_to_ptr.vmem [resolvable:$true] %s2626
          %s2628 = sshll.u32 %s2624, 4
          %s2629 = int_to_ptr.hbm [resolvable:$true] %s2628
          %2631 = dma.vmem_to_hbm [thread:$0]  %s2627, 32, %s2629, %s2584
        $region48: #{tpu_custom_call.1} parent=35 // pred_fallthru
          _
      $region36: #{tpu_custom_call.1} parent=5 // pred_fallthru
        _
      %p2632 = scmp.le.s32.totalorder 2, %s19
      // Predicated region
      $region49: #{tpu_custom_call.1} parent=5 // pred_check
        %p2633 = pneg %p2632
      $region50: #{tpu_custom_call.1} parent=5 // pred_check_branch
        %2635 = sbr.rel (%p2633) target = $region52
      $region51: #{tpu_custom_call.1} parent=5 // pred_region
        %s2636 = ssub.s32 %s19, 2
        // Predicated region
        $region53: #{tpu_custom_call.1} parent=51 // pred_check
          %p2637 = pneg %p153
        $region54: #{tpu_custom_call.1} parent=51 // pred_check_branch
          %2639 = sbr.rel (%p2637) target = $region56
        $region55: #{tpu_custom_call.1} parent=51 // pred_region
          %s2640 = sand.u32 %s138, 1
          %s2641 = scalar_lea.sflag [#allocation3], %s2640
          %s2642 = sand.u32 %s138, 1
          %s2643 = scalar_lea.vmem [#allocation2], %s2642
          %2645 = dma.done %s2641, 16
        $region56: #{tpu_custom_call.1} parent=51 // pred_fallthru
          _
        // Predicated region
        $region57: #{tpu_custom_call.1} parent=51 // pred_check
          %p2646 = pneg %p181
        $region58: #{tpu_custom_call.1} parent=51 // pred_check_branch
          %2648 = sbr.rel (%p2646) target = $region60
        $region59: #{tpu_custom_call.1} parent=51 // pred_region
          %s2649 = sand.u32 %s25, 1
          %s2650 = scalar_lea.sflag [#allocation5], %s2649
          %s2651 = sand.u32 %s166, 1
          %s2652 = smul.addr %s2651, 2
          %s2653 = scalar_lea.vmem [#allocation4], %s2652
          %2655 = dma.done %s2650, 32
        $region60: #{tpu_custom_call.1} parent=51 // pred_fallthru
          _
        // Predicated region
        $region61: #{tpu_custom_call.1} parent=51 // pred_check
          %p2656 = pneg %p209
        $region62: #{tpu_custom_call.1} parent=51 // pred_check_branch
          %2658 = sbr.rel (%p2656) target = $region64
        $region63: #{tpu_custom_call.1} parent=51 // pred_region
          %s2659 = sand.u32 %s25, 1
          %s2660 = scalar_lea.sflag [#allocation5], %s2659
          %s2661 = sand.u32 %s194, 1
          %s2662 = smul.addr %s2661, 2
          %s2663 = scalar_lea.vmem [#allocation6], %s2662
          %2665 = dma.done %s2660, 32
        $region64: #{tpu_custom_call.1} parent=51 // pred_fallthru
          _
      $region52: #{tpu_custom_call.1} parent=5 // pred_fallthru
        _
    $region6: #{tpu_custom_call.1} parent=1 // loop_footer
      %s23 = sadd.s32 1, %s19
    $region7: #{tpu_custom_call.1} parent=1 // loop_footer_branch
      %18 = sbr.rel target = $region3
    $region8: #{tpu_custom_call.1} parent=1 // loop_exit
      _
    %2666 = vsyncpa [#allocation3], 1
    %s2667 = scalar_lea.sflag [#allocation3], 1
    %2668 = vsyncpa %s2667, 1
    %2669 = vsyncpa [#allocation5], 1
    %s2670 = scalar_lea.sflag [#allocation5], 1
    %2671 = vsyncpa %s2670, 1

</llo_original>
